<compile_context>
chip_gen: v5e
topology: v5e:2x2
jax: 0.10.0
libtpu: 0.0.40
codegen_flags: <defaults>
</compile_context>

<pallas_src>
import functools

import jax
import jax.numpy as jnp
from jax import lax
from jax.experimental import pallas as pl
from jax.experimental.pallas import tpu as pltpu


def _interval_mask(idx, lo, hi, size):
    """Boolean mask lo <= idx < hi, skipping trivially-true comparisons. May return None."""
    m = None
    if lo > 0:
        m = idx >= lo
    if hi < size:
        m2 = idx < hi
        m = m2 if m is None else (m & m2)
    return m


def _cbam_kernel(x_ref, w1t_ref, w2_ref, wsa_ref, o_ref, *, H, W, K):
    pad = (K - 1) // 2
    HW = H * W

    x = x_ref[0]                                      # (C, HW) f32, lane-dense
    w1t = w1t_ref[...]                                # (C, Cr)  fc1 weight (transposed)
    w2 = w2_ref[...]                                  # (C, Cr)  fc2 weight

    # ---- channel attention: sigmoid(fc2(relu(fc1(avg))) + fc2(relu(fc1(max)))) ----
    avg_c = jnp.mean(x, axis=1, keepdims=True)        # (C, 1)  AdaptiveAvgPool2d(1)
    max_c = jnp.max(x, axis=1, keepdims=True)         # (C, 1)  AdaptiveMaxPool2d(1)
    # tiny shared MLP on the VPU (broadcast-mul + small reduces); MXU left idle on purpose.
    h_a = jnp.maximum(jnp.sum(w1t * avg_c, axis=0, keepdims=True), 0.0)   # (1, Cr)
    h_m = jnp.maximum(jnp.sum(w1t * max_c, axis=0, keepdims=True), 0.0)   # (1, Cr)
    o_a = jnp.sum(w2 * h_a, axis=1, keepdims=True)    # (C, 1)
    o_m = jnp.sum(w2 * h_m, axis=1, keepdims=True)    # (C, 1)
    ca = jax.nn.sigmoid(o_a + o_m)                    # (C, 1) channel attention

    # ---- spatial attention input: channel-pooled stats of ca*x ----
    out1 = ca * x                                     # (C, HW); live range ends right here
    avg_s = jnp.mean(out1, axis=0, keepdims=True)     # (1, HW) mean over channels
    max_s = jnp.max(out1, axis=0, keepdims=True)      # (1, HW) max  over channels

    # ---- KxK conv, done fully in the flat (1, HW) lane layout: per-tap lane roll
    #      + boundary masks (no scratch buffers, no masked row stores). ----
    n = lax.broadcasted_iota(jnp.int32, (1, HW), 1)
    if W & (W - 1) == 0:                              # power-of-two W: pure bit ops
        row = jnp.right_shift(n, W.bit_length() - 1)
        col = jnp.bitwise_and(n, W - 1)
    else:
        # TODO(synk): general-W path uses integer vector divide; not exercised here.
        row = n // W
        col = n - (n // W) * W

    # Row/col validity masks per kernel offset (None == trivially all-valid).
    row_ok = [_interval_mask(row, -(d - pad), H - (d - pad), H) for d in range(K)]
    col_ok = [_interval_mask(col, -(d - pad), W - (d - pad), W) for d in range(K)]

    acc = jnp.zeros((1, HW), jnp.float32)
    for di in range(K):
        for dj in range(K):
            w_a = wsa_ref[0 * K * K + di * K + dj]    # scalar conv weights from SMEM
            w_m = wsa_ref[1 * K * K + di * K + dj]
            combined = w_a * avg_s + w_m * max_s      # (1, HW); weights are per-tap scalars
            off = (di - pad) * W + (dj - pad)         # flat source offset for this tap
            s = (-off) % HW                           # jnp.roll semantics: out[n] = in[n+off]
            rolled = combined if s == 0 else pltpu.roll(combined, shift=s, axis=1)
            rm, cm = row_ok[di], col_ok[dj]
            mask = cm if rm is None else (rm if cm is None else (rm & cm))
            term = rolled if mask is None else jnp.where(mask, rolled, 0.0)
            acc = acc + term
    sa = jax.nn.sigmoid(acc)                          # (1, HW) spatial attention

    # residual, fused:  x + (ca*x)*sa  ==  x * (1 + ca*sa)   (single lane-dense store)
    o_ref[0] = (x * (1.0 + ca * sa)).astype(o_ref.dtype)


def cbam_pallas(x, w1, w2, w_sa, *, kernel_size=7):
    """x: (B, C, H, W) f32. w1: (C//ratio, C). w2: (C, C//ratio). w_sa: (2, K, K)."""
    B, C, H, W = x.shape
    Cr = w1.shape[0]
    HW = H * W
    K = kernel_size

    x2 = x.reshape(B, C, HW)                          # lane-dense view (HW lanes)
    w1t = jnp.transpose(w1)                           # (C, Cr)
    w_flat = w_sa.reshape(-1).astype(jnp.float32)     # (2*K*K,) -> SMEM scalars

    kern = functools.partial(_cbam_kernel, H=H, W=W, K=K)
    cost = pl.CostEstimate(
        flops=int(B * (8 * C * HW + 4 * K * K * HW)),
        transcendentals=int(B * (C + HW)),            # two sigmoids (EUP exp)
        bytes_accessed=int(2 * B * C * HW * 4 + (2 * C * Cr + 2 * K * K) * 4),
    )
    out2 = pl.pallas_call(
        kern,
        out_shape=jax.ShapeDtypeStruct((B, C, HW), x.dtype),
        grid=(B,),
        in_specs=[
            pl.BlockSpec((1, C, HW), lambda b: (b, 0, 0)),
            pl.BlockSpec((C, Cr), lambda b: (0, 0)),
            pl.BlockSpec((C, Cr), lambda b: (0, 0)),
            pl.BlockSpec(memory_space=pltpu.MemorySpace.SMEM),
        ],
        out_specs=pl.BlockSpec((1, C, HW), lambda b: (b, 0, 0)),
        compiler_params=pltpu.CompilerParams(
            dimension_semantics=("parallel",),
            vmem_limit_bytes=64 * 1024 * 1024,
        ),
        cost_estimate=cost,
    )(x2, w1t, w2, w_flat)
    return out2.reshape(B, C, H, W)


def cbam_reference(x, w1, w2, w_sa):
    """Pure-JAX reference mirroring the PyTorch module (NCHW, bias-free convs)."""
    avg = jnp.mean(x, axis=(2, 3), keepdims=True)
    mx = jnp.max(x, axis=(2, 3), keepdims=True)

    def mlp(v):
        h = jnp.einsum('oc,bcij->boij', w1, v, precision='highest')
        h = jnp.maximum(h, 0.0)
        return jnp.einsum('oc,bcij->boij', w2, h, precision='highest')

    ca = jax.nn.sigmoid(mlp(avg) + mlp(mx))
    out1 = ca * x

    a = jnp.mean(out1, axis=1, keepdims=True)
    m = jnp.max(out1, axis=1, keepdims=True)
    sp = jnp.concatenate([a, m], axis=1)              # (B, 2, H, W)
    K = w_sa.shape[-1]
    pad = (K - 1) // 2
    conv = lax.conv_general_dilated(
        sp, w_sa.reshape(1, 2, K, K), window_strides=(1, 1),
        padding=((pad, pad), (pad, pad)),
        dimension_numbers=('NCHW', 'OIHW', 'NCHW'),
        precision=lax.Precision.HIGHEST)
    sa = jax.nn.sigmoid(conv)
    return x + out1 * sa


if __name__ == "__main__":
    key = jax.random.PRNGKey(0)
    B, C, H, W = 2, 32, 16, 16
    ratio, ksize = 16, 7
    Cr = C // ratio

    k0, k1, k2, k3 = jax.random.split(key, 4)
    x = jax.random.normal(k0, (B, C, H, W), dtype=jnp.float32)
    # deterministic synthetic parameters (shapes from the module __init__)
    w1 = 0.1 * jax.random.normal(k1, (Cr, C), dtype=jnp.float32)     # fc1: Conv2d(C, C//r, 1)
    w2 = 0.1 * jax.random.normal(k2, (C, Cr), dtype=jnp.float32)     # fc2: Conv2d(C//r, C, 1)
    w_sa = 0.1 * jax.random.normal(k3, (2, ksize, ksize), dtype=jnp.float32)  # Conv2d(2,1,7)

    out = jax.block_until_ready(cbam_pallas(x, w1, w2, w_sa, kernel_size=ksize))
    ref = cbam_reference(x, w1, w2, w_sa)

    assert out.shape == x.shape and out.dtype == x.dtype
    if not jnp.allclose(out, ref, atol=1e-3, rtol=1e-3):
        raise AssertionError("Pallas CBAM output mismatch vs JAX reference")
    print("KERNEL_OK")
</pallas_src>

<mosaic_0001>
module attributes {stable_mosaic.version = 11 : i64} {
  func.func @_cbam_kernel(%arg0: i32, %arg1: memref<1x32x256xf32, #tpu.memory_space<vmem>>, %arg2: memref<32x2xf32, #tpu.memory_space<vmem>>, %arg3: memref<32x2xf32, #tpu.memory_space<vmem>>, %arg4: memref<98xf32, #tpu.memory_space<smem>>, %arg5: memref<1x32x256xf32, #tpu.memory_space<vmem>>) attributes {dimension_semantics = [#tpu.dimension_semantics<parallel>], iteration_bounds = array<i64: 2>, scalar_prefetch = 0 : i64, scratch_operands = 0 : i64, tpu.core_type = #tpu.core_type<tc>, window_params = [{transform_indices = @transform_0, window_bounds = array<i64: 1, 32, 256>}, {pipeline_mode = #tpu.pipeline_mode<synchronous>, transform_indices = @transform_1, window_bounds = array<i64: 32, 2>}, {pipeline_mode = #tpu.pipeline_mode<synchronous>, transform_indices = @transform_2, window_bounds = array<i64: 32, 2>}, {transform_indices = @transform_3, window_bounds = array<i64: 98>}, {transform_indices = @transform_4, window_bounds = array<i64: 1, 32, 256>}]} {
    %c0 = arith.constant 0 : index
    %c0_0 = arith.constant 0 : index
    %c0_1 = arith.constant 0 : index
    %0 = vector.load %arg1[%c0, %c0_0, %c0_1] : memref<1x32x256xf32, #tpu.memory_space<vmem>>, vector<1x32x256xf32>
    %1 = vector.shape_cast %0 : vector<1x32x256xf32> to vector<32x256xf32>
    %c0_2 = arith.constant 0 : index
    %c0_3 = arith.constant 0 : index
    %2 = vector.load %arg2[%c0_2, %c0_3] : memref<32x2xf32, #tpu.memory_space<vmem>>, vector<32x2xf32>
    %c0_4 = arith.constant 0 : index
    %c0_5 = arith.constant 0 : index
    %3 = vector.load %arg3[%c0_4, %c0_5] : memref<32x2xf32, #tpu.memory_space<vmem>>, vector<32x2xf32>
    %cst = arith.constant dense<0.000000e+00> : vector<32xf32>
    %4 = vector.multi_reduction <add>, %1, %cst [1] : vector<32x256xf32> to vector<32xf32>
    %5 = vector.shape_cast %4 : vector<32xf32> to vector<32x1xf32>
    %cst_6 = arith.constant 2.560000e+02 : f32
    %6 = vector.broadcast %cst_6 : f32 to vector<32x1xf32>
    %7 = arith.divf %5, %6 : vector<32x1xf32>
    %cst_7 = arith.constant dense<0xFF800000> : vector<32xf32>
    %8 = vector.multi_reduction <maximumf>, %1, %cst_7 [1] : vector<32x256xf32> to vector<32xf32>
    %9 = vector.shape_cast %8 : vector<32xf32> to vector<32x1xf32>
    %10 = vector.broadcast %7 : vector<32x1xf32> to vector<32x2xf32>
    %11 = arith.mulf %2, %10 : vector<32x2xf32>
    %cst_8 = arith.constant dense<0.000000e+00> : vector<2xf32>
    %12 = vector.multi_reduction <add>, %11, %cst_8 [0] : vector<32x2xf32> to vector<2xf32>
    %13 = vector.shape_cast %12 : vector<2xf32> to vector<1x2xf32>
    %cst_9 = arith.constant 0.000000e+00 : f32
    %14 = vector.broadcast %cst_9 : f32 to vector<1x2xf32>
    %15 = arith.maximumf %13, %14 : vector<1x2xf32>
    %16 = vector.broadcast %9 : vector<32x1xf32> to vector<32x2xf32>
    %17 = arith.mulf %2, %16 : vector<32x2xf32>
    %cst_10 = arith.constant dense<0.000000e+00> : vector<2xf32>
    %18 = vector.multi_reduction <add>, %17, %cst_10 [0] : vector<32x2xf32> to vector<2xf32>
    %19 = vector.shape_cast %18 : vector<2xf32> to vector<1x2xf32>
    %cst_11 = arith.constant 0.000000e+00 : f32
    %20 = vector.broadcast %cst_11 : f32 to vector<1x2xf32>
    %21 = arith.maximumf %19, %20 : vector<1x2xf32>
    %22 = vector.broadcast %15 : vector<1x2xf32> to vector<32x2xf32>
    %23 = arith.mulf %3, %22 : vector<32x2xf32>
    %cst_12 = arith.constant dense<0.000000e+00> : vector<32xf32>
    %24 = vector.multi_reduction <add>, %23, %cst_12 [1] : vector<32x2xf32> to vector<32xf32>
    %25 = vector.shape_cast %24 : vector<32xf32> to vector<32x1xf32>
    %26 = vector.broadcast %21 : vector<1x2xf32> to vector<32x2xf32>
    %27 = arith.mulf %3, %26 : vector<32x2xf32>
    %cst_13 = arith.constant dense<0.000000e+00> : vector<32xf32>
    %28 = vector.multi_reduction <add>, %27, %cst_13 [1] : vector<32x2xf32> to vector<32xf32>
    %29 = vector.shape_cast %28 : vector<32xf32> to vector<32x1xf32>
    %30 = arith.addf %25, %29 : vector<32x1xf32>
    %31 = arith.negf %30 : vector<32x1xf32>
    %32 = math.exp %31 : vector<32x1xf32>
    %cst_14 = arith.constant 1.000000e+00 : f32
    %33 = vector.broadcast %cst_14 : f32 to vector<32x1xf32>
    %34 = arith.addf %33, %32 : vector<32x1xf32>
    %35 = arith.divf %33, %34 : vector<32x1xf32>
    %36 = vector.broadcast %35 : vector<32x1xf32> to vector<32x256xf32>
    %37 = arith.mulf %36, %1 : vector<32x256xf32>
    %cst_15 = arith.constant dense<0.000000e+00> : vector<256xf32>
    %38 = vector.multi_reduction <add>, %37, %cst_15 [0] : vector<32x256xf32> to vector<256xf32>
    %39 = vector.shape_cast %38 : vector<256xf32> to vector<1x256xf32>
    %cst_16 = arith.constant 3.200000e+01 : f32
    %40 = vector.broadcast %cst_16 : f32 to vector<1x256xf32>
    %41 = arith.divf %39, %40 : vector<1x256xf32>
    %cst_17 = arith.constant dense<0xFF800000> : vector<256xf32>
    %42 = vector.multi_reduction <maximumf>, %37, %cst_17 [0] : vector<32x256xf32> to vector<256xf32>
    %43 = vector.shape_cast %42 : vector<256xf32> to vector<1x256xf32>
    %44 = tpu.iota {dimensions = array<i32: 1>} : vector<1x256xi32>
    %c4_i32 = arith.constant 4 : i32
    %45 = vector.broadcast %c4_i32 : i32 to vector<1x256xi32>
    %46 = arith.shrsi %44, %45 : vector<1x256xi32>
    %c15_i32 = arith.constant 15 : i32
    %47 = vector.broadcast %c15_i32 : i32 to vector<1x256xi32>
    %48 = arith.andi %44, %47 : vector<1x256xi32>
    %c3_i32 = arith.constant 3 : i32
    %49 = vector.broadcast %c3_i32 : i32 to vector<1x256xi32>
    %50 = arith.cmpi sge, %46, %49 : vector<1x256xi32>
    %c2_i32 = arith.constant 2 : i32
    %51 = vector.broadcast %c2_i32 : i32 to vector<1x256xi32>
    %52 = arith.cmpi sge, %46, %51 : vector<1x256xi32>
    %c1_i32 = arith.constant 1 : i32
    %53 = vector.broadcast %c1_i32 : i32 to vector<1x256xi32>
    %54 = arith.cmpi sge, %46, %53 : vector<1x256xi32>
    %c15_i32_18 = arith.constant 15 : i32
    %55 = vector.broadcast %c15_i32_18 : i32 to vector<1x256xi32>
    %56 = arith.cmpi slt, %46, %55 : vector<1x256xi32>
    %c14_i32 = arith.constant 14 : i32
    %57 = vector.broadcast %c14_i32 : i32 to vector<1x256xi32>
    %58 = arith.cmpi slt, %46, %57 : vector<1x256xi32>
    %c13_i32 = arith.constant 13 : i32
    %59 = vector.broadcast %c13_i32 : i32 to vector<1x256xi32>
    %60 = arith.cmpi slt, %46, %59 : vector<1x256xi32>
    %c3_i32_19 = arith.constant 3 : i32
    %61 = vector.broadcast %c3_i32_19 : i32 to vector<1x256xi32>
    %62 = arith.cmpi sge, %48, %61 : vector<1x256xi32>
    %c2_i32_20 = arith.constant 2 : i32
    %63 = vector.broadcast %c2_i32_20 : i32 to vector<1x256xi32>
    %64 = arith.cmpi sge, %48, %63 : vector<1x256xi32>
    %c1_i32_21 = arith.constant 1 : i32
    %65 = vector.broadcast %c1_i32_21 : i32 to vector<1x256xi32>
    %66 = arith.cmpi sge, %48, %65 : vector<1x256xi32>
    %c15_i32_22 = arith.constant 15 : i32
    %67 = vector.broadcast %c15_i32_22 : i32 to vector<1x256xi32>
    %68 = arith.cmpi slt, %48, %67 : vector<1x256xi32>
    %c14_i32_23 = arith.constant 14 : i32
    %69 = vector.broadcast %c14_i32_23 : i32 to vector<1x256xi32>
    %70 = arith.cmpi slt, %48, %69 : vector<1x256xi32>
    %c13_i32_24 = arith.constant 13 : i32
    %71 = vector.broadcast %c13_i32_24 : i32 to vector<1x256xi32>
    %72 = arith.cmpi slt, %48, %71 : vector<1x256xi32>
    %cst_25 = arith.constant 0.000000e+00 : f32
    %73 = vector.broadcast %cst_25 : f32 to vector<1x256xf32>
    %c0_26 = arith.constant 0 : index
    %74 = memref.load %arg4[%c0_26] : memref<98xf32, #tpu.memory_space<smem>>
    %c49 = arith.constant 49 : index
    %75 = memref.load %arg4[%c49] : memref<98xf32, #tpu.memory_space<smem>>
    %76 = vector.broadcast %74 : f32 to vector<1x256xf32>
    %77 = arith.mulf %76, %41 : vector<1x256xf32>
    %78 = vector.broadcast %75 : f32 to vector<1x256xf32>
    %79 = arith.mulf %78, %43 : vector<1x256xf32>
    %80 = arith.addf %77, %79 : vector<1x256xf32>
    %c51_i32 = arith.constant 51 : i32
    %81 = tpu.dynamic_rotate %80 by %c51_i32 dim 1 : vector<1x256xf32>, i32 -> vector<1x256xf32>
    %82 = arith.andi %50, %62 : vector<1x256xi1>
    %cst_27 = arith.constant 0.000000e+00 : f32
    %83 = vector.broadcast %cst_27 : f32 to vector<1x256xf32>
    %84 = arith.select %82, %81, %83 : vector<1x256xi1>, vector<1x256xf32>
    %85 = arith.addf %73, %84 : vector<1x256xf32>
    %c1 = arith.constant 1 : index
    %86 = memref.load %arg4[%c1] : memref<98xf32, #tpu.memory_space<smem>>
    %c50 = arith.constant 50 : index
    %87 = memref.load %arg4[%c50] : memref<98xf32, #tpu.memory_space<smem>>
    %88 = vector.broadcast %86 : f32 to vector<1x256xf32>
    %89 = arith.mulf %88, %41 : vector<1x256xf32>
    %90 = vector.broadcast %87 : f32 to vector<1x256xf32>
    %91 = arith.mulf %90, %43 : vector<1x256xf32>
    %92 = arith.addf %89, %91 : vector<1x256xf32>
    %c50_i32 = arith.constant 50 : i32
    %93 = tpu.dynamic_rotate %92 by %c50_i32 dim 1 : vector<1x256xf32>, i32 -> vector<1x256xf32>
    %94 = arith.andi %50, %64 : vector<1x256xi1>
    %cst_28 = arith.constant 0.000000e+00 : f32
    %95 = vector.broadcast %cst_28 : f32 to vector<1x256xf32>
    %96 = arith.select %94, %93, %95 : vector<1x256xi1>, vector<1x256xf32>
    %97 = arith.addf %85, %96 : vector<1x256xf32>
    %c2 = arith.constant 2 : index
    %98 = memref.load %arg4[%c2] : memref<98xf32, #tpu.memory_space<smem>>
    %c51 = arith.constant 51 : index
    %99 = memref.load %arg4[%c51] : memref<98xf32, #tpu.memory_space<smem>>
    %100 = vector.broadcast %98 : f32 to vector<1x256xf32>
    %101 = arith.mulf %100, %41 : vector<1x256xf32>
    %102 = vector.broadcast %99 : f32 to vector<1x256xf32>
    %103 = arith.mulf %102, %43 : vector<1x256xf32>
    %104 = arith.addf %101, %103 : vector<1x256xf32>
    %c49_i32 = arith.constant 49 : i32
    %105 = tpu.dynamic_rotate %104 by %c49_i32 dim 1 : vector<1x256xf32>, i32 -> vector<1x256xf32>
    %106 = arith.andi %50, %66 : vector<1x256xi1>
    %cst_29 = arith.constant 0.000000e+00 : f32
    %107 = vector.broadcast %cst_29 : f32 to vector<1x256xf32>
    %108 = arith.select %106, %105, %107 : vector<1x256xi1>, vector<1x256xf32>
    %109 = arith.addf %97, %108 : vector<1x256xf32>
    %c3 = arith.constant 3 : index
    %110 = memref.load %arg4[%c3] : memref<98xf32, #tpu.memory_space<smem>>
    %c52 = arith.constant 52 : index
    %111 = memref.load %arg4[%c52] : memref<98xf32, #tpu.memory_space<smem>>
    %112 = vector.broadcast %110 : f32 to vector<1x256xf32>
    %113 = arith.mulf %112, %41 : vector<1x256xf32>
    %114 = vector.broadcast %111 : f32 to vector<1x256xf32>
    %115 = arith.mulf %114, %43 : vector<1x256xf32>
    %116 = arith.addf %113, %115 : vector<1x256xf32>
    %c48_i32 = arith.constant 48 : i32
    %117 = tpu.dynamic_rotate %116 by %c48_i32 dim 1 : vector<1x256xf32>, i32 -> vector<1x256xf32>
    %cst_30 = arith.constant 0.000000e+00 : f32
    %118 = vector.broadcast %cst_30 : f32 to vector<1x256xf32>
    %119 = arith.select %50, %117, %118 : vector<1x256xi1>, vector<1x256xf32>
    %120 = arith.addf %109, %119 : vector<1x256xf32>
    %c4 = arith.constant 4 : index
    %121 = memref.load %arg4[%c4] : memref<98xf32, #tpu.memory_space<smem>>
    %c53 = arith.constant 53 : index
    %122 = memref.load %arg4[%c53] : memref<98xf32, #tpu.memory_space<smem>>
    %123 = vector.broadcast %121 : f32 to vector<1x256xf32>
    %124 = arith.mulf %123, %41 : vector<1x256xf32>
    %125 = vector.broadcast %122 : f32 to vector<1x256xf32>
    %126 = arith.mulf %125, %43 : vector<1x256xf32>
    %127 = arith.addf %124, %126 : vector<1x256xf32>
    %c47_i32 = arith.constant 47 : i32
    %128 = tpu.dynamic_rotate %127 by %c47_i32 dim 1 : vector<1x256xf32>, i32 -> vector<1x256xf32>
    %129 = arith.andi %50, %68 : vector<1x256xi1>
    %cst_31 = arith.constant 0.000000e+00 : f32
    %130 = vector.broadcast %cst_31 : f32 to vector<1x256xf32>
    %131 = arith.select %129, %128, %130 : vector<1x256xi1>, vector<1x256xf32>
    %132 = arith.addf %120, %131 : vector<1x256xf32>
    %c5 = arith.constant 5 : index
    %133 = memref.load %arg4[%c5] : memref<98xf32, #tpu.memory_space<smem>>
    %c54 = arith.constant 54 : index
    %134 = memref.load %arg4[%c54] : memref<98xf32, #tpu.memory_space<smem>>
    %135 = vector.broadcast %133 : f32 to vector<1x256xf32>
    %136 = arith.mulf %135, %41 : vector<1x256xf32>
    %137 = vector.broadcast %134 : f32 to vector<1x256xf32>
    %138 = arith.mulf %137, %43 : vector<1x256xf32>
    %139 = arith.addf %136, %138 : vector<1x256xf32>
    %c46_i32 = arith.constant 46 : i32
    %140 = tpu.dynamic_rotate %139 by %c46_i32 dim 1 : vector<1x256xf32>, i32 -> vector<1x256xf32>
    %141 = arith.andi %50, %70 : vector<1x256xi1>
    %cst_32 = arith.constant 0.000000e+00 : f32
    %142 = vector.broadcast %cst_32 : f32 to vector<1x256xf32>
    %143 = arith.select %141, %140, %142 : vector<1x256xi1>, vector<1x256xf32>
    %144 = arith.addf %132, %143 : vector<1x256xf32>
    %c6 = arith.constant 6 : index
    %145 = memref.load %arg4[%c6] : memref<98xf32, #tpu.memory_space<smem>>
    %c55 = arith.constant 55 : index
    %146 = memref.load %arg4[%c55] : memref<98xf32, #tpu.memory_space<smem>>
    %147 = vector.broadcast %145 : f32 to vector<1x256xf32>
    %148 = arith.mulf %147, %41 : vector<1x256xf32>
    %149 = vector.broadcast %146 : f32 to vector<1x256xf32>
    %150 = arith.mulf %149, %43 : vector<1x256xf32>
    %151 = arith.addf %148, %150 : vector<1x256xf32>
    %c45_i32 = arith.constant 45 : i32
    %152 = tpu.dynamic_rotate %151 by %c45_i32 dim 1 : vector<1x256xf32>, i32 -> vector<1x256xf32>
    %153 = arith.andi %50, %72 : vector<1x256xi1>
    %cst_33 = arith.constant 0.000000e+00 : f32
    %154 = vector.broadcast %cst_33 : f32 to vector<1x256xf32>
    %155 = arith.select %153, %152, %154 : vector<1x256xi1>, vector<1x256xf32>
    %156 = arith.addf %144, %155 : vector<1x256xf32>
    %c7 = arith.constant 7 : index
    %157 = memref.load %arg4[%c7] : memref<98xf32, #tpu.memory_space<smem>>
    %c56 = arith.constant 56 : index
    %158 = memref.load %arg4[%c56] : memref<98xf32, #tpu.memory_space<smem>>
    %159 = vector.broadcast %157 : f32 to vector<1x256xf32>
    %160 = arith.mulf %159, %41 : vector<1x256xf32>
    %161 = vector.broadcast %158 : f32 to vector<1x256xf32>
    %162 = arith.mulf %161, %43 : vector<1x256xf32>
    %163 = arith.addf %160, %162 : vector<1x256xf32>
    %c35_i32 = arith.constant 35 : i32
    %164 = tpu.dynamic_rotate %163 by %c35_i32 dim 1 : vector<1x256xf32>, i32 -> vector<1x256xf32>
    %165 = arith.andi %52, %62 : vector<1x256xi1>
    %cst_34 = arith.constant 0.000000e+00 : f32
    %166 = vector.broadcast %cst_34 : f32 to vector<1x256xf32>
    %167 = arith.select %165, %164, %166 : vector<1x256xi1>, vector<1x256xf32>
    %168 = arith.addf %156, %167 : vector<1x256xf32>
    %c8 = arith.constant 8 : index
    %169 = memref.load %arg4[%c8] : memref<98xf32, #tpu.memory_space<smem>>
    %c57 = arith.constant 57 : index
    %170 = memref.load %arg4[%c57] : memref<98xf32, #tpu.memory_space<smem>>
    %171 = vector.broadcast %169 : f32 to vector<1x256xf32>
    %172 = arith.mulf %171, %41 : vector<1x256xf32>
    %173 = vector.broadcast %170 : f32 to vector<1x256xf32>
    %174 = arith.mulf %173, %43 : vector<1x256xf32>
    %175 = arith.addf %172, %174 : vector<1x256xf32>
    %c34_i32 = arith.constant 34 : i32
    %176 = tpu.dynamic_rotate %175 by %c34_i32 dim 1 : vector<1x256xf32>, i32 -> vector<1x256xf32>
    %177 = arith.andi %52, %64 : vector<1x256xi1>
    %cst_35 = arith.constant 0.000000e+00 : f32
    %178 = vector.broadcast %cst_35 : f32 to vector<1x256xf32>
    %179 = arith.select %177, %176, %178 : vector<1x256xi1>, vector<1x256xf32>
    %180 = arith.addf %168, %179 : vector<1x256xf32>
    %c9 = arith.constant 9 : index
    %181 = memref.load %arg4[%c9] : memref<98xf32, #tpu.memory_space<smem>>
    %c58 = arith.constant 58 : index
    %182 = memref.load %arg4[%c58] : memref<98xf32, #tpu.memory_space<smem>>
    %183 = vector.broadcast %181 : f32 to vector<1x256xf32>
    %184 = arith.mulf %183, %41 : vector<1x256xf32>
    %185 = vector.broadcast %182 : f32 to vector<1x256xf32>
    %186 = arith.mulf %185, %43 : vector<1x256xf32>
    %187 = arith.addf %184, %186 : vector<1x256xf32>
    %c33_i32 = arith.constant 33 : i32
    %188 = tpu.dynamic_rotate %187 by %c33_i32 dim 1 : vector<1x256xf32>, i32 -> vector<1x256xf32>
    %189 = arith.andi %52, %66 : vector<1x256xi1>
    %cst_36 = arith.constant 0.000000e+00 : f32
    %190 = vector.broadcast %cst_36 : f32 to vector<1x256xf32>
    %191 = arith.select %189, %188, %190 : vector<1x256xi1>, vector<1x256xf32>
    %192 = arith.addf %180, %191 : vector<1x256xf32>
    %c10 = arith.constant 10 : index
    %193 = memref.load %arg4[%c10] : memref<98xf32, #tpu.memory_space<smem>>
    %c59 = arith.constant 59 : index
    %194 = memref.load %arg4[%c59] : memref<98xf32, #tpu.memory_space<smem>>
    %195 = vector.broadcast %193 : f32 to vector<1x256xf32>
    %196 = arith.mulf %195, %41 : vector<1x256xf32>
    %197 = vector.broadcast %194 : f32 to vector<1x256xf32>
    %198 = arith.mulf %197, %43 : vector<1x256xf32>
    %199 = arith.addf %196, %198 : vector<1x256xf32>
    %c32_i32 = arith.constant 32 : i32
    %200 = tpu.dynamic_rotate %199 by %c32_i32 dim 1 : vector<1x256xf32>, i32 -> vector<1x256xf32>
    %cst_37 = arith.constant 0.000000e+00 : f32
    %201 = vector.broadcast %cst_37 : f32 to vector<1x256xf32>
    %202 = arith.select %52, %200, %201 : vector<1x256xi1>, vector<1x256xf32>
    %203 = arith.addf %192, %202 : vector<1x256xf32>
    %c11 = arith.constant 11 : index
    %204 = memref.load %arg4[%c11] : memref<98xf32, #tpu.memory_space<smem>>
    %c60 = arith.constant 60 : index
    %205 = memref.load %arg4[%c60] : memref<98xf32, #tpu.memory_space<smem>>
    %206 = vector.broadcast %204 : f32 to vector<1x256xf32>
    %207 = arith.mulf %206, %41 : vector<1x256xf32>
    %208 = vector.broadcast %205 : f32 to vector<1x256xf32>
    %209 = arith.mulf %208, %43 : vector<1x256xf32>
    %210 = arith.addf %207, %209 : vector<1x256xf32>
    %c31_i32 = arith.constant 31 : i32
    %211 = tpu.dynamic_rotate %210 by %c31_i32 dim 1 : vector<1x256xf32>, i32 -> vector<1x256xf32>
    %212 = arith.andi %52, %68 : vector<1x256xi1>
    %cst_38 = arith.constant 0.000000e+00 : f32
    %213 = vector.broadcast %cst_38 : f32 to vector<1x256xf32>
    %214 = arith.select %212, %211, %213 : vector<1x256xi1>, vector<1x256xf32>
    %215 = arith.addf %203, %214 : vector<1x256xf32>
    %c12 = arith.constant 12 : index
    %216 = memref.load %arg4[%c12] : memref<98xf32, #tpu.memory_space<smem>>
    %c61 = arith.constant 61 : index
    %217 = memref.load %arg4[%c61] : memref<98xf32, #tpu.memory_space<smem>>
    %218 = vector.broadcast %216 : f32 to vector<1x256xf32>
    %219 = arith.mulf %218, %41 : vector<1x256xf32>
    %220 = vector.broadcast %217 : f32 to vector<1x256xf32>
    %221 = arith.mulf %220, %43 : vector<1x256xf32>
    %222 = arith.addf %219, %221 : vector<1x256xf32>
    %c30_i32 = arith.constant 30 : i32
    %223 = tpu.dynamic_rotate %222 by %c30_i32 dim 1 : vector<1x256xf32>, i32 -> vector<1x256xf32>
    %224 = arith.andi %52, %70 : vector<1x256xi1>
    %cst_39 = arith.constant 0.000000e+00 : f32
    %225 = vector.broadcast %cst_39 : f32 to vector<1x256xf32>
    %226 = arith.select %224, %223, %225 : vector<1x256xi1>, vector<1x256xf32>
    %227 = arith.addf %215, %226 : vector<1x256xf32>
    %c13 = arith.constant 13 : index
    %228 = memref.load %arg4[%c13] : memref<98xf32, #tpu.memory_space<smem>>
    %c62 = arith.constant 62 : index
    %229 = memref.load %arg4[%c62] : memref<98xf32, #tpu.memory_space<smem>>
    %230 = vector.broadcast %228 : f32 to vector<1x256xf32>
    %231 = arith.mulf %230, %41 : vector<1x256xf32>
    %232 = vector.broadcast %229 : f32 to vector<1x256xf32>
    %233 = arith.mulf %232, %43 : vector<1x256xf32>
    %234 = arith.addf %231, %233 : vector<1x256xf32>
    %c29_i32 = arith.constant 29 : i32
    %235 = tpu.dynamic_rotate %234 by %c29_i32 dim 1 : vector<1x256xf32>, i32 -> vector<1x256xf32>
    %236 = arith.andi %52, %72 : vector<1x256xi1>
    %cst_40 = arith.constant 0.000000e+00 : f32
    %237 = vector.broadcast %cst_40 : f32 to vector<1x256xf32>
    %238 = arith.select %236, %235, %237 : vector<1x256xi1>, vector<1x256xf32>
    %239 = arith.addf %227, %238 : vector<1x256xf32>
    %c14 = arith.constant 14 : index
    %240 = memref.load %arg4[%c14] : memref<98xf32, #tpu.memory_space<smem>>
    %c63 = arith.constant 63 : index
    %241 = memref.load %arg4[%c63] : memref<98xf32, #tpu.memory_space<smem>>
    %242 = vector.broadcast %240 : f32 to vector<1x256xf32>
    %243 = arith.mulf %242, %41 : vector<1x256xf32>
    %244 = vector.broadcast %241 : f32 to vector<1x256xf32>
    %245 = arith.mulf %244, %43 : vector<1x256xf32>
    %246 = arith.addf %243, %245 : vector<1x256xf32>
    %c19_i32 = arith.constant 19 : i32
    %247 = tpu.dynamic_rotate %246 by %c19_i32 dim 1 : vector<1x256xf32>, i32 -> vector<1x256xf32>
    %248 = arith.andi %54, %62 : vector<1x256xi1>
    %cst_41 = arith.constant 0.000000e+00 : f32
    %249 = vector.broadcast %cst_41 : f32 to vector<1x256xf32>
    %250 = arith.select %248, %247, %249 : vector<1x256xi1>, vector<1x256xf32>
    %251 = arith.addf %239, %250 : vector<1x256xf32>
    %c15 = arith.constant 15 : index
    %252 = memref.load %arg4[%c15] : memref<98xf32, #tpu.memory_space<smem>>
    %c64 = arith.constant 64 : index
    %253 = memref.load %arg4[%c64] : memref<98xf32, #tpu.memory_space<smem>>
    %254 = vector.broadcast %252 : f32 to vector<1x256xf32>
    %255 = arith.mulf %254, %41 : vector<1x256xf32>
    %256 = vector.broadcast %253 : f32 to vector<1x256xf32>
    %257 = arith.mulf %256, %43 : vector<1x256xf32>
    %258 = arith.addf %255, %257 : vector<1x256xf32>
    %c18_i32 = arith.constant 18 : i32
    %259 = tpu.dynamic_rotate %258 by %c18_i32 dim 1 : vector<1x256xf32>, i32 -> vector<1x256xf32>
    %260 = arith.andi %54, %64 : vector<1x256xi1>
    %cst_42 = arith.constant 0.000000e+00 : f32
    %261 = vector.broadcast %cst_42 : f32 to vector<1x256xf32>
    %262 = arith.select %260, %259, %261 : vector<1x256xi1>, vector<1x256xf32>
    %263 = arith.addf %251, %262 : vector<1x256xf32>
    %c16 = arith.constant 16 : index
    %264 = memref.load %arg4[%c16] : memref<98xf32, #tpu.memory_space<smem>>
    %c65 = arith.constant 65 : index
    %265 = memref.load %arg4[%c65] : memref<98xf32, #tpu.memory_space<smem>>
    %266 = vector.broadcast %264 : f32 to vector<1x256xf32>
    %267 = arith.mulf %266, %41 : vector<1x256xf32>
    %268 = vector.broadcast %265 : f32 to vector<1x256xf32>
    %269 = arith.mulf %268, %43 : vector<1x256xf32>
    %270 = arith.addf %267, %269 : vector<1x256xf32>
    %c17_i32 = arith.constant 17 : i32
    %271 = tpu.dynamic_rotate %270 by %c17_i32 dim 1 : vector<1x256xf32>, i32 -> vector<1x256xf32>
    %272 = arith.andi %54, %66 : vector<1x256xi1>
    %cst_43 = arith.constant 0.000000e+00 : f32
    %273 = vector.broadcast %cst_43 : f32 to vector<1x256xf32>
    %274 = arith.select %272, %271, %273 : vector<1x256xi1>, vector<1x256xf32>
    %275 = arith.addf %263, %274 : vector<1x256xf32>
    %c17 = arith.constant 17 : index
    %276 = memref.load %arg4[%c17] : memref<98xf32, #tpu.memory_space<smem>>
    %c66 = arith.constant 66 : index
    %277 = memref.load %arg4[%c66] : memref<98xf32, #tpu.memory_space<smem>>
    %278 = vector.broadcast %276 : f32 to vector<1x256xf32>
    %279 = arith.mulf %278, %41 : vector<1x256xf32>
    %280 = vector.broadcast %277 : f32 to vector<1x256xf32>
    %281 = arith.mulf %280, %43 : vector<1x256xf32>
    %282 = arith.addf %279, %281 : vector<1x256xf32>
    %c16_i32 = arith.constant 16 : i32
    %283 = tpu.dynamic_rotate %282 by %c16_i32 dim 1 : vector<1x256xf32>, i32 -> vector<1x256xf32>
    %cst_44 = arith.constant 0.000000e+00 : f32
    %284 = vector.broadcast %cst_44 : f32 to vector<1x256xf32>
    %285 = arith.select %54, %283, %284 : vector<1x256xi1>, vector<1x256xf32>
    %286 = arith.addf %275, %285 : vector<1x256xf32>
    %c18 = arith.constant 18 : index
    %287 = memref.load %arg4[%c18] : memref<98xf32, #tpu.memory_space<smem>>
    %c67 = arith.constant 67 : index
    %288 = memref.load %arg4[%c67] : memref<98xf32, #tpu.memory_space<smem>>
    %289 = vector.broadcast %287 : f32 to vector<1x256xf32>
    %290 = arith.mulf %289, %41 : vector<1x256xf32>
    %291 = vector.broadcast %288 : f32 to vector<1x256xf32>
    %292 = arith.mulf %291, %43 : vector<1x256xf32>
    %293 = arith.addf %290, %292 : vector<1x256xf32>
    %c15_i32_45 = arith.constant 15 : i32
    %294 = tpu.dynamic_rotate %293 by %c15_i32_45 dim 1 : vector<1x256xf32>, i32 -> vector<1x256xf32>
    %295 = arith.andi %54, %68 : vector<1x256xi1>
    %cst_46 = arith.constant 0.000000e+00 : f32
    %296 = vector.broadcast %cst_46 : f32 to vector<1x256xf32>
    %297 = arith.select %295, %294, %296 : vector<1x256xi1>, vector<1x256xf32>
    %298 = arith.addf %286, %297 : vector<1x256xf32>
    %c19 = arith.constant 19 : index
    %299 = memref.load %arg4[%c19] : memref<98xf32, #tpu.memory_space<smem>>
    %c68 = arith.constant 68 : index
    %300 = memref.load %arg4[%c68] : memref<98xf32, #tpu.memory_space<smem>>
    %301 = vector.broadcast %299 : f32 to vector<1x256xf32>
    %302 = arith.mulf %301, %41 : vector<1x256xf32>
    %303 = vector.broadcast %300 : f32 to vector<1x256xf32>
    %304 = arith.mulf %303, %43 : vector<1x256xf32>
    %305 = arith.addf %302, %304 : vector<1x256xf32>
    %c14_i32_47 = arith.constant 14 : i32
    %306 = tpu.dynamic_rotate %305 by %c14_i32_47 dim 1 : vector<1x256xf32>, i32 -> vector<1x256xf32>
    %307 = arith.andi %54, %70 : vector<1x256xi1>
    %cst_48 = arith.constant 0.000000e+00 : f32
    %308 = vector.broadcast %cst_48 : f32 to vector<1x256xf32>
    %309 = arith.select %307, %306, %308 : vector<1x256xi1>, vector<1x256xf32>
    %310 = arith.addf %298, %309 : vector<1x256xf32>
    %c20 = arith.constant 20 : index
    %311 = memref.load %arg4[%c20] : memref<98xf32, #tpu.memory_space<smem>>
    %c69 = arith.constant 69 : index
    %312 = memref.load %arg4[%c69] : memref<98xf32, #tpu.memory_space<smem>>
    %313 = vector.broadcast %311 : f32 to vector<1x256xf32>
    %314 = arith.mulf %313, %41 : vector<1x256xf32>
    %315 = vector.broadcast %312 : f32 to vector<1x256xf32>
    %316 = arith.mulf %315, %43 : vector<1x256xf32>
    %317 = arith.addf %314, %316 : vector<1x256xf32>
    %c13_i32_49 = arith.constant 13 : i32
    %318 = tpu.dynamic_rotate %317 by %c13_i32_49 dim 1 : vector<1x256xf32>, i32 -> vector<1x256xf32>
    %319 = arith.andi %54, %72 : vector<1x256xi1>
    %cst_50 = arith.constant 0.000000e+00 : f32
    %320 = vector.broadcast %cst_50 : f32 to vector<1x256xf32>
    %321 = arith.select %319, %318, %320 : vector<1x256xi1>, vector<1x256xf32>
    %322 = arith.addf %310, %321 : vector<1x256xf32>
    %c21 = arith.constant 21 : index
    %323 = memref.load %arg4[%c21] : memref<98xf32, #tpu.memory_space<smem>>
    %c70 = arith.constant 70 : index
    %324 = memref.load %arg4[%c70] : memref<98xf32, #tpu.memory_space<smem>>
    %325 = vector.broadcast %323 : f32 to vector<1x256xf32>
    %326 = arith.mulf %325, %41 : vector<1x256xf32>
    %327 = vector.broadcast %324 : f32 to vector<1x256xf32>
    %328 = arith.mulf %327, %43 : vector<1x256xf32>
    %329 = arith.addf %326, %328 : vector<1x256xf32>
    %c3_i32_51 = arith.constant 3 : i32
    %330 = tpu.dynamic_rotate %329 by %c3_i32_51 dim 1 : vector<1x256xf32>, i32 -> vector<1x256xf32>
    %cst_52 = arith.constant 0.000000e+00 : f32
    %331 = vector.broadcast %cst_52 : f32 to vector<1x256xf32>
    %332 = arith.select %62, %330, %331 : vector<1x256xi1>, vector<1x256xf32>
    %333 = arith.addf %322, %332 : vector<1x256xf32>
    %c22 = arith.constant 22 : index
    %334 = memref.load %arg4[%c22] : memref<98xf32, #tpu.memory_space<smem>>
    %c71 = arith.constant 71 : index
    %335 = memref.load %arg4[%c71] : memref<98xf32, #tpu.memory_space<smem>>
    %336 = vector.broadcast %334 : f32 to vector<1x256xf32>
    %337 = arith.mulf %336, %41 : vector<1x256xf32>
    %338 = vector.broadcast %335 : f32 to vector<1x256xf32>
    %339 = arith.mulf %338, %43 : vector<1x256xf32>
    %340 = arith.addf %337, %339 : vector<1x256xf32>
    %c2_i32_53 = arith.constant 2 : i32
    %341 = tpu.dynamic_rotate %340 by %c2_i32_53 dim 1 : vector<1x256xf32>, i32 -> vector<1x256xf32>
    %cst_54 = arith.constant 0.000000e+00 : f32
    %342 = vector.broadcast %cst_54 : f32 to vector<1x256xf32>
    %343 = arith.select %64, %341, %342 : vector<1x256xi1>, vector<1x256xf32>
    %344 = arith.addf %333, %343 : vector<1x256xf32>
    %c23 = arith.constant 23 : index
    %345 = memref.load %arg4[%c23] : memref<98xf32, #tpu.memory_space<smem>>
    %c72 = arith.constant 72 : index
    %346 = memref.load %arg4[%c72] : memref<98xf32, #tpu.memory_space<smem>>
    %347 = vector.broadcast %345 : f32 to vector<1x256xf32>
    %348 = arith.mulf %347, %41 : vector<1x256xf32>
    %349 = vector.broadcast %346 : f32 to vector<1x256xf32>
    %350 = arith.mulf %349, %43 : vector<1x256xf32>
    %351 = arith.addf %348, %350 : vector<1x256xf32>
    %c1_i32_55 = arith.constant 1 : i32
    %352 = tpu.dynamic_rotate %351 by %c1_i32_55 dim 1 : vector<1x256xf32>, i32 -> vector<1x256xf32>
    %cst_56 = arith.constant 0.000000e+00 : f32
    %353 = vector.broadcast %cst_56 : f32 to vector<1x256xf32>
    %354 = arith.select %66, %352, %353 : vector<1x256xi1>, vector<1x256xf32>
    %355 = arith.addf %344, %354 : vector<1x256xf32>
    %c24 = arith.constant 24 : index
    %356 = memref.load %arg4[%c24] : memref<98xf32, #tpu.memory_space<smem>>
    %c73 = arith.constant 73 : index
    %357 = memref.load %arg4[%c73] : memref<98xf32, #tpu.memory_space<smem>>
    %358 = vector.broadcast %356 : f32 to vector<1x256xf32>
    %359 = arith.mulf %358, %41 : vector<1x256xf32>
    %360 = vector.broadcast %357 : f32 to vector<1x256xf32>
    %361 = arith.mulf %360, %43 : vector<1x256xf32>
    %362 = arith.addf %359, %361 : vector<1x256xf32>
    %363 = arith.addf %355, %362 : vector<1x256xf32>
    %c25 = arith.constant 25 : index
    %364 = memref.load %arg4[%c25] : memref<98xf32, #tpu.memory_space<smem>>
    %c74 = arith.constant 74 : index
    %365 = memref.load %arg4[%c74] : memref<98xf32, #tpu.memory_space<smem>>
    %366 = vector.broadcast %364 : f32 to vector<1x256xf32>
    %367 = arith.mulf %366, %41 : vector<1x256xf32>
    %368 = vector.broadcast %365 : f32 to vector<1x256xf32>
    %369 = arith.mulf %368, %43 : vector<1x256xf32>
    %370 = arith.addf %367, %369 : vector<1x256xf32>
    %c255_i32 = arith.constant 255 : i32
    %371 = tpu.dynamic_rotate %370 by %c255_i32 dim 1 : vector<1x256xf32>, i32 -> vector<1x256xf32>
    %cst_57 = arith.constant 0.000000e+00 : f32
    %372 = vector.broadcast %cst_57 : f32 to vector<1x256xf32>
    %373 = arith.select %68, %371, %372 : vector<1x256xi1>, vector<1x256xf32>
    %374 = arith.addf %363, %373 : vector<1x256xf32>
    %c26 = arith.constant 26 : index
    %375 = memref.load %arg4[%c26] : memref<98xf32, #tpu.memory_space<smem>>
    %c75 = arith.constant 75 : index
    %376 = memref.load %arg4[%c75] : memref<98xf32, #tpu.memory_space<smem>>
    %377 = vector.broadcast %375 : f32 to vector<1x256xf32>
    %378 = arith.mulf %377, %41 : vector<1x256xf32>
    %379 = vector.broadcast %376 : f32 to vector<1x256xf32>
    %380 = arith.mulf %379, %43 : vector<1x256xf32>
    %381 = arith.addf %378, %380 : vector<1x256xf32>
    %c254_i32 = arith.constant 254 : i32
    %382 = tpu.dynamic_rotate %381 by %c254_i32 dim 1 : vector<1x256xf32>, i32 -> vector<1x256xf32>
    %cst_58 = arith.constant 0.000000e+00 : f32
    %383 = vector.broadcast %cst_58 : f32 to vector<1x256xf32>
    %384 = arith.select %70, %382, %383 : vector<1x256xi1>, vector<1x256xf32>
    %385 = arith.addf %374, %384 : vector<1x256xf32>
    %c27 = arith.constant 27 : index
    %386 = memref.load %arg4[%c27] : memref<98xf32, #tpu.memory_space<smem>>
    %c76 = arith.constant 76 : index
    %387 = memref.load %arg4[%c76] : memref<98xf32, #tpu.memory_space<smem>>
    %388 = vector.broadcast %386 : f32 to vector<1x256xf32>
    %389 = arith.mulf %388, %41 : vector<1x256xf32>
    %390 = vector.broadcast %387 : f32 to vector<1x256xf32>
    %391 = arith.mulf %390, %43 : vector<1x256xf32>
    %392 = arith.addf %389, %391 : vector<1x256xf32>
    %c253_i32 = arith.constant 253 : i32
    %393 = tpu.dynamic_rotate %392 by %c253_i32 dim 1 : vector<1x256xf32>, i32 -> vector<1x256xf32>
    %cst_59 = arith.constant 0.000000e+00 : f32
    %394 = vector.broadcast %cst_59 : f32 to vector<1x256xf32>
    %395 = arith.select %72, %393, %394 : vector<1x256xi1>, vector<1x256xf32>
    %396 = arith.addf %385, %395 : vector<1x256xf32>
    %c28 = arith.constant 28 : index
    %397 = memref.load %arg4[%c28] : memref<98xf32, #tpu.memory_space<smem>>
    %c77 = arith.constant 77 : index
    %398 = memref.load %arg4[%c77] : memref<98xf32, #tpu.memory_space<smem>>
    %399 = vector.broadcast %397 : f32 to vector<1x256xf32>
    %400 = arith.mulf %399, %41 : vector<1x256xf32>
    %401 = vector.broadcast %398 : f32 to vector<1x256xf32>
    %402 = arith.mulf %401, %43 : vector<1x256xf32>
    %403 = arith.addf %400, %402 : vector<1x256xf32>
    %c243_i32 = arith.constant 243 : i32
    %404 = tpu.dynamic_rotate %403 by %c243_i32 dim 1 : vector<1x256xf32>, i32 -> vector<1x256xf32>
    %405 = arith.andi %56, %62 : vector<1x256xi1>
    %cst_60 = arith.constant 0.000000e+00 : f32
    %406 = vector.broadcast %cst_60 : f32 to vector<1x256xf32>
    %407 = arith.select %405, %404, %406 : vector<1x256xi1>, vector<1x256xf32>
    %408 = arith.addf %396, %407 : vector<1x256xf32>
    %c29 = arith.constant 29 : index
    %409 = memref.load %arg4[%c29] : memref<98xf32, #tpu.memory_space<smem>>
    %c78 = arith.constant 78 : index
    %410 = memref.load %arg4[%c78] : memref<98xf32, #tpu.memory_space<smem>>
    %411 = vector.broadcast %409 : f32 to vector<1x256xf32>
    %412 = arith.mulf %411, %41 : vector<1x256xf32>
    %413 = vector.broadcast %410 : f32 to vector<1x256xf32>
    %414 = arith.mulf %413, %43 : vector<1x256xf32>
    %415 = arith.addf %412, %414 : vector<1x256xf32>
    %c242_i32 = arith.constant 242 : i32
    %416 = tpu.dynamic_rotate %415 by %c242_i32 dim 1 : vector<1x256xf32>, i32 -> vector<1x256xf32>
    %417 = arith.andi %56, %64 : vector<1x256xi1>
    %cst_61 = arith.constant 0.000000e+00 : f32
    %418 = vector.broadcast %cst_61 : f32 to vector<1x256xf32>
    %419 = arith.select %417, %416, %418 : vector<1x256xi1>, vector<1x256xf32>
    %420 = arith.addf %408, %419 : vector<1x256xf32>
    %c30 = arith.constant 30 : index
    %421 = memref.load %arg4[%c30] : memref<98xf32, #tpu.memory_space<smem>>
    %c79 = arith.constant 79 : index
    %422 = memref.load %arg4[%c79] : memref<98xf32, #tpu.memory_space<smem>>
    %423 = vector.broadcast %421 : f32 to vector<1x256xf32>
    %424 = arith.mulf %423, %41 : vector<1x256xf32>
    %425 = vector.broadcast %422 : f32 to vector<1x256xf32>
    %426 = arith.mulf %425, %43 : vector<1x256xf32>
    %427 = arith.addf %424, %426 : vector<1x256xf32>
    %c241_i32 = arith.constant 241 : i32
    %428 = tpu.dynamic_rotate %427 by %c241_i32 dim 1 : vector<1x256xf32>, i32 -> vector<1x256xf32>
    %429 = arith.andi %56, %66 : vector<1x256xi1>
    %cst_62 = arith.constant 0.000000e+00 : f32
    %430 = vector.broadcast %cst_62 : f32 to vector<1x256xf32>
    %431 = arith.select %429, %428, %430 : vector<1x256xi1>, vector<1x256xf32>
    %432 = arith.addf %420, %431 : vector<1x256xf32>
    %c31 = arith.constant 31 : index
    %433 = memref.load %arg4[%c31] : memref<98xf32, #tpu.memory_space<smem>>
    %c80 = arith.constant 80 : index
    %434 = memref.load %arg4[%c80] : memref<98xf32, #tpu.memory_space<smem>>
    %435 = vector.broadcast %433 : f32 to vector<1x256xf32>
    %436 = arith.mulf %435, %41 : vector<1x256xf32>
    %437 = vector.broadcast %434 : f32 to vector<1x256xf32>
    %438 = arith.mulf %437, %43 : vector<1x256xf32>
    %439 = arith.addf %436, %438 : vector<1x256xf32>
    %c240_i32 = arith.constant 240 : i32
    %440 = tpu.dynamic_rotate %439 by %c240_i32 dim 1 : vector<1x256xf32>, i32 -> vector<1x256xf32>
    %cst_63 = arith.constant 0.000000e+00 : f32
    %441 = vector.broadcast %cst_63 : f32 to vector<1x256xf32>
    %442 = arith.select %56, %440, %441 : vector<1x256xi1>, vector<1x256xf32>
    %443 = arith.addf %432, %442 : vector<1x256xf32>
    %c32 = arith.constant 32 : index
    %444 = memref.load %arg4[%c32] : memref<98xf32, #tpu.memory_space<smem>>
    %c81 = arith.constant 81 : index
    %445 = memref.load %arg4[%c81] : memref<98xf32, #tpu.memory_space<smem>>
    %446 = vector.broadcast %444 : f32 to vector<1x256xf32>
    %447 = arith.mulf %446, %41 : vector<1x256xf32>
    %448 = vector.broadcast %445 : f32 to vector<1x256xf32>
    %449 = arith.mulf %448, %43 : vector<1x256xf32>
    %450 = arith.addf %447, %449 : vector<1x256xf32>
    %c239_i32 = arith.constant 239 : i32
    %451 = tpu.dynamic_rotate %450 by %c239_i32 dim 1 : vector<1x256xf32>, i32 -> vector<1x256xf32>
    %452 = arith.andi %56, %68 : vector<1x256xi1>
    %cst_64 = arith.constant 0.000000e+00 : f32
    %453 = vector.broadcast %cst_64 : f32 to vector<1x256xf32>
    %454 = arith.select %452, %451, %453 : vector<1x256xi1>, vector<1x256xf32>
    %455 = arith.addf %443, %454 : vector<1x256xf32>
    %c33 = arith.constant 33 : index
    %456 = memref.load %arg4[%c33] : memref<98xf32, #tpu.memory_space<smem>>
    %c82 = arith.constant 82 : index
    %457 = memref.load %arg4[%c82] : memref<98xf32, #tpu.memory_space<smem>>
    %458 = vector.broadcast %456 : f32 to vector<1x256xf32>
    %459 = arith.mulf %458, %41 : vector<1x256xf32>
    %460 = vector.broadcast %457 : f32 to vector<1x256xf32>
    %461 = arith.mulf %460, %43 : vector<1x256xf32>
    %462 = arith.addf %459, %461 : vector<1x256xf32>
    %c238_i32 = arith.constant 238 : i32
    %463 = tpu.dynamic_rotate %462 by %c238_i32 dim 1 : vector<1x256xf32>, i32 -> vector<1x256xf32>
    %464 = arith.andi %56, %70 : vector<1x256xi1>
    %cst_65 = arith.constant 0.000000e+00 : f32
    %465 = vector.broadcast %cst_65 : f32 to vector<1x256xf32>
    %466 = arith.select %464, %463, %465 : vector<1x256xi1>, vector<1x256xf32>
    %467 = arith.addf %455, %466 : vector<1x256xf32>
    %c34 = arith.constant 34 : index
    %468 = memref.load %arg4[%c34] : memref<98xf32, #tpu.memory_space<smem>>
    %c83 = arith.constant 83 : index
    %469 = memref.load %arg4[%c83] : memref<98xf32, #tpu.memory_space<smem>>
    %470 = vector.broadcast %468 : f32 to vector<1x256xf32>
    %471 = arith.mulf %470, %41 : vector<1x256xf32>
    %472 = vector.broadcast %469 : f32 to vector<1x256xf32>
    %473 = arith.mulf %472, %43 : vector<1x256xf32>
    %474 = arith.addf %471, %473 : vector<1x256xf32>
    %c237_i32 = arith.constant 237 : i32
    %475 = tpu.dynamic_rotate %474 by %c237_i32 dim 1 : vector<1x256xf32>, i32 -> vector<1x256xf32>
    %476 = arith.andi %56, %72 : vector<1x256xi1>
    %cst_66 = arith.constant 0.000000e+00 : f32
    %477 = vector.broadcast %cst_66 : f32 to vector<1x256xf32>
    %478 = arith.select %476, %475, %477 : vector<1x256xi1>, vector<1x256xf32>
    %479 = arith.addf %467, %478 : vector<1x256xf32>
    %c35 = arith.constant 35 : index
    %480 = memref.load %arg4[%c35] : memref<98xf32, #tpu.memory_space<smem>>
    %c84 = arith.constant 84 : index
    %481 = memref.load %arg4[%c84] : memref<98xf32, #tpu.memory_space<smem>>
    %482 = vector.broadcast %480 : f32 to vector<1x256xf32>
    %483 = arith.mulf %482, %41 : vector<1x256xf32>
    %484 = vector.broadcast %481 : f32 to vector<1x256xf32>
    %485 = arith.mulf %484, %43 : vector<1x256xf32>
    %486 = arith.addf %483, %485 : vector<1x256xf32>
    %c227_i32 = arith.constant 227 : i32
    %487 = tpu.dynamic_rotate %486 by %c227_i32 dim 1 : vector<1x256xf32>, i32 -> vector<1x256xf32>
    %488 = arith.andi %58, %62 : vector<1x256xi1>
    %cst_67 = arith.constant 0.000000e+00 : f32
    %489 = vector.broadcast %cst_67 : f32 to vector<1x256xf32>
    %490 = arith.select %488, %487, %489 : vector<1x256xi1>, vector<1x256xf32>
    %491 = arith.addf %479, %490 : vector<1x256xf32>
    %c36 = arith.constant 36 : index
    %492 = memref.load %arg4[%c36] : memref<98xf32, #tpu.memory_space<smem>>
    %c85 = arith.constant 85 : index
    %493 = memref.load %arg4[%c85] : memref<98xf32, #tpu.memory_space<smem>>
    %494 = vector.broadcast %492 : f32 to vector<1x256xf32>
    %495 = arith.mulf %494, %41 : vector<1x256xf32>
    %496 = vector.broadcast %493 : f32 to vector<1x256xf32>
    %497 = arith.mulf %496, %43 : vector<1x256xf32>
    %498 = arith.addf %495, %497 : vector<1x256xf32>
    %c226_i32 = arith.constant 226 : i32
    %499 = tpu.dynamic_rotate %498 by %c226_i32 dim 1 : vector<1x256xf32>, i32 -> vector<1x256xf32>
    %500 = arith.andi %58, %64 : vector<1x256xi1>
    %cst_68 = arith.constant 0.000000e+00 : f32
    %501 = vector.broadcast %cst_68 : f32 to vector<1x256xf32>
    %502 = arith.select %500, %499, %501 : vector<1x256xi1>, vector<1x256xf32>
    %503 = arith.addf %491, %502 : vector<1x256xf32>
    %c37 = arith.constant 37 : index
    %504 = memref.load %arg4[%c37] : memref<98xf32, #tpu.memory_space<smem>>
    %c86 = arith.constant 86 : index
    %505 = memref.load %arg4[%c86] : memref<98xf32, #tpu.memory_space<smem>>
    %506 = vector.broadcast %504 : f32 to vector<1x256xf32>
    %507 = arith.mulf %506, %41 : vector<1x256xf32>
    %508 = vector.broadcast %505 : f32 to vector<1x256xf32>
    %509 = arith.mulf %508, %43 : vector<1x256xf32>
    %510 = arith.addf %507, %509 : vector<1x256xf32>
    %c225_i32 = arith.constant 225 : i32
    %511 = tpu.dynamic_rotate %510 by %c225_i32 dim 1 : vector<1x256xf32>, i32 -> vector<1x256xf32>
    %512 = arith.andi %58, %66 : vector<1x256xi1>
    %cst_69 = arith.constant 0.000000e+00 : f32
    %513 = vector.broadcast %cst_69 : f32 to vector<1x256xf32>
    %514 = arith.select %512, %511, %513 : vector<1x256xi1>, vector<1x256xf32>
    %515 = arith.addf %503, %514 : vector<1x256xf32>
    %c38 = arith.constant 38 : index
    %516 = memref.load %arg4[%c38] : memref<98xf32, #tpu.memory_space<smem>>
    %c87 = arith.constant 87 : index
    %517 = memref.load %arg4[%c87] : memref<98xf32, #tpu.memory_space<smem>>
    %518 = vector.broadcast %516 : f32 to vector<1x256xf32>
    %519 = arith.mulf %518, %41 : vector<1x256xf32>
    %520 = vector.broadcast %517 : f32 to vector<1x256xf32>
    %521 = arith.mulf %520, %43 : vector<1x256xf32>
    %522 = arith.addf %519, %521 : vector<1x256xf32>
    %c224_i32 = arith.constant 224 : i32
    %523 = tpu.dynamic_rotate %522 by %c224_i32 dim 1 : vector<1x256xf32>, i32 -> vector<1x256xf32>
    %cst_70 = arith.constant 0.000000e+00 : f32
    %524 = vector.broadcast %cst_70 : f32 to vector<1x256xf32>
    %525 = arith.select %58, %523, %524 : vector<1x256xi1>, vector<1x256xf32>
    %526 = arith.addf %515, %525 : vector<1x256xf32>
    %c39 = arith.constant 39 : index
    %527 = memref.load %arg4[%c39] : memref<98xf32, #tpu.memory_space<smem>>
    %c88 = arith.constant 88 : index
    %528 = memref.load %arg4[%c88] : memref<98xf32, #tpu.memory_space<smem>>
    %529 = vector.broadcast %527 : f32 to vector<1x256xf32>
    %530 = arith.mulf %529, %41 : vector<1x256xf32>
    %531 = vector.broadcast %528 : f32 to vector<1x256xf32>
    %532 = arith.mulf %531, %43 : vector<1x256xf32>
    %533 = arith.addf %530, %532 : vector<1x256xf32>
    %c223_i32 = arith.constant 223 : i32
    %534 = tpu.dynamic_rotate %533 by %c223_i32 dim 1 : vector<1x256xf32>, i32 -> vector<1x256xf32>
    %535 = arith.andi %58, %68 : vector<1x256xi1>
    %cst_71 = arith.constant 0.000000e+00 : f32
    %536 = vector.broadcast %cst_71 : f32 to vector<1x256xf32>
    %537 = arith.select %535, %534, %536 : vector<1x256xi1>, vector<1x256xf32>
    %538 = arith.addf %526, %537 : vector<1x256xf32>
    %c40 = arith.constant 40 : index
    %539 = memref.load %arg4[%c40] : memref<98xf32, #tpu.memory_space<smem>>
    %c89 = arith.constant 89 : index
    %540 = memref.load %arg4[%c89] : memref<98xf32, #tpu.memory_space<smem>>
    %541 = vector.broadcast %539 : f32 to vector<1x256xf32>
    %542 = arith.mulf %541, %41 : vector<1x256xf32>
    %543 = vector.broadcast %540 : f32 to vector<1x256xf32>
    %544 = arith.mulf %543, %43 : vector<1x256xf32>
    %545 = arith.addf %542, %544 : vector<1x256xf32>
    %c222_i32 = arith.constant 222 : i32
    %546 = tpu.dynamic_rotate %545 by %c222_i32 dim 1 : vector<1x256xf32>, i32 -> vector<1x256xf32>
    %547 = arith.andi %58, %70 : vector<1x256xi1>
    %cst_72 = arith.constant 0.000000e+00 : f32
    %548 = vector.broadcast %cst_72 : f32 to vector<1x256xf32>
    %549 = arith.select %547, %546, %548 : vector<1x256xi1>, vector<1x256xf32>
    %550 = arith.addf %538, %549 : vector<1x256xf32>
    %c41 = arith.constant 41 : index
    %551 = memref.load %arg4[%c41] : memref<98xf32, #tpu.memory_space<smem>>
    %c90 = arith.constant 90 : index
    %552 = memref.load %arg4[%c90] : memref<98xf32, #tpu.memory_space<smem>>
    %553 = vector.broadcast %551 : f32 to vector<1x256xf32>
    %554 = arith.mulf %553, %41 : vector<1x256xf32>
    %555 = vector.broadcast %552 : f32 to vector<1x256xf32>
    %556 = arith.mulf %555, %43 : vector<1x256xf32>
    %557 = arith.addf %554, %556 : vector<1x256xf32>
    %c221_i32 = arith.constant 221 : i32
    %558 = tpu.dynamic_rotate %557 by %c221_i32 dim 1 : vector<1x256xf32>, i32 -> vector<1x256xf32>
    %559 = arith.andi %58, %72 : vector<1x256xi1>
    %cst_73 = arith.constant 0.000000e+00 : f32
    %560 = vector.broadcast %cst_73 : f32 to vector<1x256xf32>
    %561 = arith.select %559, %558, %560 : vector<1x256xi1>, vector<1x256xf32>
    %562 = arith.addf %550, %561 : vector<1x256xf32>
    %c42 = arith.constant 42 : index
    %563 = memref.load %arg4[%c42] : memref<98xf32, #tpu.memory_space<smem>>
    %c91 = arith.constant 91 : index
    %564 = memref.load %arg4[%c91] : memref<98xf32, #tpu.memory_space<smem>>
    %565 = vector.broadcast %563 : f32 to vector<1x256xf32>
    %566 = arith.mulf %565, %41 : vector<1x256xf32>
    %567 = vector.broadcast %564 : f32 to vector<1x256xf32>
    %568 = arith.mulf %567, %43 : vector<1x256xf32>
    %569 = arith.addf %566, %568 : vector<1x256xf32>
    %c211_i32 = arith.constant 211 : i32
    %570 = tpu.dynamic_rotate %569 by %c211_i32 dim 1 : vector<1x256xf32>, i32 -> vector<1x256xf32>
    %571 = arith.andi %60, %62 : vector<1x256xi1>
    %cst_74 = arith.constant 0.000000e+00 : f32
    %572 = vector.broadcast %cst_74 : f32 to vector<1x256xf32>
    %573 = arith.select %571, %570, %572 : vector<1x256xi1>, vector<1x256xf32>
    %574 = arith.addf %562, %573 : vector<1x256xf32>
    %c43 = arith.constant 43 : index
    %575 = memref.load %arg4[%c43] : memref<98xf32, #tpu.memory_space<smem>>
    %c92 = arith.constant 92 : index
    %576 = memref.load %arg4[%c92] : memref<98xf32, #tpu.memory_space<smem>>
    %577 = vector.broadcast %575 : f32 to vector<1x256xf32>
    %578 = arith.mulf %577, %41 : vector<1x256xf32>
    %579 = vector.broadcast %576 : f32 to vector<1x256xf32>
    %580 = arith.mulf %579, %43 : vector<1x256xf32>
    %581 = arith.addf %578, %580 : vector<1x256xf32>
    %c210_i32 = arith.constant 210 : i32
    %582 = tpu.dynamic_rotate %581 by %c210_i32 dim 1 : vector<1x256xf32>, i32 -> vector<1x256xf32>
    %583 = arith.andi %60, %64 : vector<1x256xi1>
    %cst_75 = arith.constant 0.000000e+00 : f32
    %584 = vector.broadcast %cst_75 : f32 to vector<1x256xf32>
    %585 = arith.select %583, %582, %584 : vector<1x256xi1>, vector<1x256xf32>
    %586 = arith.addf %574, %585 : vector<1x256xf32>
    %c44 = arith.constant 44 : index
    %587 = memref.load %arg4[%c44] : memref<98xf32, #tpu.memory_space<smem>>
    %c93 = arith.constant 93 : index
    %588 = memref.load %arg4[%c93] : memref<98xf32, #tpu.memory_space<smem>>
    %589 = vector.broadcast %587 : f32 to vector<1x256xf32>
    %590 = arith.mulf %589, %41 : vector<1x256xf32>
    %591 = vector.broadcast %588 : f32 to vector<1x256xf32>
    %592 = arith.mulf %591, %43 : vector<1x256xf32>
    %593 = arith.addf %590, %592 : vector<1x256xf32>
    %c209_i32 = arith.constant 209 : i32
    %594 = tpu.dynamic_rotate %593 by %c209_i32 dim 1 : vector<1x256xf32>, i32 -> vector<1x256xf32>
    %595 = arith.andi %60, %66 : vector<1x256xi1>
    %cst_76 = arith.constant 0.000000e+00 : f32
    %596 = vector.broadcast %cst_76 : f32 to vector<1x256xf32>
    %597 = arith.select %595, %594, %596 : vector<1x256xi1>, vector<1x256xf32>
    %598 = arith.addf %586, %597 : vector<1x256xf32>
    %c45 = arith.constant 45 : index
    %599 = memref.load %arg4[%c45] : memref<98xf32, #tpu.memory_space<smem>>
    %c94 = arith.constant 94 : index
    %600 = memref.load %arg4[%c94] : memref<98xf32, #tpu.memory_space<smem>>
    %601 = vector.broadcast %599 : f32 to vector<1x256xf32>
    %602 = arith.mulf %601, %41 : vector<1x256xf32>
    %603 = vector.broadcast %600 : f32 to vector<1x256xf32>
    %604 = arith.mulf %603, %43 : vector<1x256xf32>
    %605 = arith.addf %602, %604 : vector<1x256xf32>
    %c208_i32 = arith.constant 208 : i32
    %606 = tpu.dynamic_rotate %605 by %c208_i32 dim 1 : vector<1x256xf32>, i32 -> vector<1x256xf32>
    %cst_77 = arith.constant 0.000000e+00 : f32
    %607 = vector.broadcast %cst_77 : f32 to vector<1x256xf32>
    %608 = arith.select %60, %606, %607 : vector<1x256xi1>, vector<1x256xf32>
    %609 = arith.addf %598, %608 : vector<1x256xf32>
    %c46 = arith.constant 46 : index
    %610 = memref.load %arg4[%c46] : memref<98xf32, #tpu.memory_space<smem>>
    %c95 = arith.constant 95 : index
    %611 = memref.load %arg4[%c95] : memref<98xf32, #tpu.memory_space<smem>>
    %612 = vector.broadcast %610 : f32 to vector<1x256xf32>
    %613 = arith.mulf %612, %41 : vector<1x256xf32>
    %614 = vector.broadcast %611 : f32 to vector<1x256xf32>
    %615 = arith.mulf %614, %43 : vector<1x256xf32>
    %616 = arith.addf %613, %615 : vector<1x256xf32>
    %c207_i32 = arith.constant 207 : i32
    %617 = tpu.dynamic_rotate %616 by %c207_i32 dim 1 : vector<1x256xf32>, i32 -> vector<1x256xf32>
    %618 = arith.andi %60, %68 : vector<1x256xi1>
    %cst_78 = arith.constant 0.000000e+00 : f32
    %619 = vector.broadcast %cst_78 : f32 to vector<1x256xf32>
    %620 = arith.select %618, %617, %619 : vector<1x256xi1>, vector<1x256xf32>
    %621 = arith.addf %609, %620 : vector<1x256xf32>
    %c47 = arith.constant 47 : index
    %622 = memref.load %arg4[%c47] : memref<98xf32, #tpu.memory_space<smem>>
    %c96 = arith.constant 96 : index
    %623 = memref.load %arg4[%c96] : memref<98xf32, #tpu.memory_space<smem>>
    %624 = vector.broadcast %622 : f32 to vector<1x256xf32>
    %625 = arith.mulf %624, %41 : vector<1x256xf32>
    %626 = vector.broadcast %623 : f32 to vector<1x256xf32>
    %627 = arith.mulf %626, %43 : vector<1x256xf32>
    %628 = arith.addf %625, %627 : vector<1x256xf32>
    %c206_i32 = arith.constant 206 : i32
    %629 = tpu.dynamic_rotate %628 by %c206_i32 dim 1 : vector<1x256xf32>, i32 -> vector<1x256xf32>
    %630 = arith.andi %60, %70 : vector<1x256xi1>
    %cst_79 = arith.constant 0.000000e+00 : f32
    %631 = vector.broadcast %cst_79 : f32 to vector<1x256xf32>
    %632 = arith.select %630, %629, %631 : vector<1x256xi1>, vector<1x256xf32>
    %633 = arith.addf %621, %632 : vector<1x256xf32>
    %c48 = arith.constant 48 : index
    %634 = memref.load %arg4[%c48] : memref<98xf32, #tpu.memory_space<smem>>
    %c97 = arith.constant 97 : index
    %635 = memref.load %arg4[%c97] : memref<98xf32, #tpu.memory_space<smem>>
    %636 = vector.broadcast %634 : f32 to vector<1x256xf32>
    %637 = arith.mulf %636, %41 : vector<1x256xf32>
    %638 = vector.broadcast %635 : f32 to vector<1x256xf32>
    %639 = arith.mulf %638, %43 : vector<1x256xf32>
    %640 = arith.addf %637, %639 : vector<1x256xf32>
    %c205_i32 = arith.constant 205 : i32
    %641 = tpu.dynamic_rotate %640 by %c205_i32 dim 1 : vector<1x256xf32>, i32 -> vector<1x256xf32>
    %642 = arith.andi %60, %72 : vector<1x256xi1>
    %cst_80 = arith.constant 0.000000e+00 : f32
    %643 = vector.broadcast %cst_80 : f32 to vector<1x256xf32>
    %644 = arith.select %642, %641, %643 : vector<1x256xi1>, vector<1x256xf32>
    %645 = arith.addf %633, %644 : vector<1x256xf32>
    %646 = arith.negf %645 : vector<1x256xf32>
    %647 = math.exp %646 : vector<1x256xf32>
    %cst_81 = arith.constant 1.000000e+00 : f32
    %648 = vector.broadcast %cst_81 : f32 to vector<1x256xf32>
    %649 = arith.addf %648, %647 : vector<1x256xf32>
    %650 = arith.divf %648, %649 : vector<1x256xf32>
    %651 = vector.broadcast %35 : vector<32x1xf32> to vector<32x256xf32>
    %652 = vector.broadcast %650 : vector<1x256xf32> to vector<32x256xf32>
    %653 = arith.mulf %651, %652 : vector<32x256xf32>
    %cst_82 = arith.constant 1.000000e+00 : f32
    %654 = vector.broadcast %cst_82 : f32 to vector<32x256xf32>
    %655 = arith.addf %654, %653 : vector<32x256xf32>
    %656 = arith.mulf %1, %655 : vector<32x256xf32>
    %c0_83 = arith.constant 0 : index
    %c0_84 = arith.constant 0 : index
    %c0_85 = arith.constant 0 : index
    %657 = vector.load %arg5[%c0_83, %c0_84, %c0_85] : memref<1x32x256xf32, #tpu.memory_space<vmem>>, vector<1x32x256xf32>
    %658 = vector.shape_cast %657 : vector<1x32x256xf32> to vector<32x256xf32>
    %659 = vector.shape_cast %656 : vector<32x256xf32> to vector<1x32x256xf32>
    tpu.vector_store %arg5[%c0_83, %c0_84, %c0_85], %659 {strides = array<i32>} : memref<1x32x256xf32, #tpu.memory_space<vmem>>, vector<1x32x256xf32>,
    return
  }
  func.func @transform_0(%arg0: i32) -> (i32, i32, i32) {
    %c0_i32 = arith.constant 0 : i32
    %c0_i32_0 = arith.constant 0 : i32
    %c0_i32_1 = arith.constant 0 : i32
    return %arg0, %c0_i32, %c0_i32_0 : i32, i32, i32
  }
  func.func @transform_1(%arg0: i32) -> (i32, i32) {
    %c0_i32 = arith.constant 0 : i32
    %c0_i32_0 = arith.constant 0 : i32
    %c0_i32_1 = arith.constant 0 : i32
    return %c0_i32, %c0_i32_0 : i32, i32
  }
  func.func @transform_2(%arg0: i32) -> (i32, i32) {
    %c0_i32 = arith.constant 0 : i32
    %c0_i32_0 = arith.constant 0 : i32
    %c0_i32_1 = arith.constant 0 : i32
    return %c0_i32, %c0_i32_0 : i32, i32
  }
  func.func @transform_3(%arg0: i32) -> i32 {
    %c0_i32 = arith.constant 0 : i32
    %c0_i32_0 = arith.constant 0 : i32
    return %c0_i32 : i32
  }
  func.func @transform_4(%arg0: i32) -> (i32, i32, i32) {
    %c0_i32 = arith.constant 0 : i32
    %c0_i32_0 = arith.constant 0 : i32
    %c0_i32_1 = arith.constant 0 : i32
    return %arg0, %c0_i32, %c0_i32_0 : i32, i32, i32
  }
}

</mosaic_0001>

<llo_original>
// kernel: tpu_custom_call.1
$region0: #{tpu_custom_call.1}
  #allocation0 [shape = 'u32[]', space=smem, size = 0x4, offset = 0x4, fixed_abs, tag = 'smem constant byte address 0x4 - core index']
  #allocation1 [shape = 'u32[72,128]{1,0:T(1,128)}', space=vmem, size = 0x9000, scoped, tag = 'internal scratch']
  %s0 = inlined_call_operand.hbm [shape: f32[2,32,256], index: 0, kind: input, shape index: {}]
  %s1 = inlined_call_operand.vmem [shape: f32[32,2], index: 1, kind: input, shape index: {}]
  %s2 = inlined_call_operand.vmem [shape: f32[32,2], index: 2, kind: input, shape index: {}]
  %s3 = inlined_call_operand.vmem [shape: f32[98], index: 3, kind: input, shape index: {}]
  %s4 = inlined_call_operand.hbm [shape: f32[2,32,256], index: 4, kind: output, shape index: {}]
  %s5 = sld [smem:[#allocation0]]
  $region57: #{tpu_custom_call.1} parent=0
    _
  %s7 = ssub.s32 1, %s5
  %s8 = scalar_select 0, %s7, %s5
  $region1: #{tpu_custom_call.1} parent=0
    #allocation2 [shape = 'u8[65536]{0}', space=vmem, size = 0x10000, scoped, tag = 'input window, operand 0']
    #allocation3 [shape = 's32[2]{0}', space=sflag, size = 0x8, scoped, tag = 'scoped memory for tpu_custom_call.1']
    #allocation4 [shape = 's32[2]{0}', space=sflag, size = 0x8, scoped, tag = 'scoped memory for tpu_custom_call.1']
    #allocation5 [shape = 's32[2]{0}', space=sflag, size = 0x8, scoped, tag = 'scoped memory for tpu_custom_call.1']
    #allocation6 [shape = 'u8[512]{0}', space=smem, size = 0x200, scoped, tag = 'input window, operand 3, single buffered']
    #allocation7 [shape = 'u8[65536]{0}', space=vmem, size = 0x10000, scoped, tag = 'output window, operand 0']
    %9 = vsyncpa [#allocation3], 0
    %s10 = scalar_lea.sflag [#allocation3], 1
    %11 = vsyncpa %s10, 0
    %12 = vsyncpa [#allocation5], 0
    %13 = vsyncpa [#allocation4], 0
    %s14 = scalar_lea.sflag [#allocation4], 1
    %15 = vsyncpa %s14, 0
    loop: start=0, step=1, limit=4
    $region2: #{tpu_custom_call.1} parent=1 // loop_pre_header
      _
    $region3: #{tpu_custom_call.1} parent=1 // loop_header
      %s17 = sphi 0, %s21
      %p18 = scmp.ge.s32.totalorder %s17, 4
      %s27 = sphi 0, %s29
      %s30 = sphi 0, %s27
      %s31 = sphi 0, %s30
      %s47 = sphi 0, %s31
      %s51 = sphi 0, %s51
      %s53 = sphi 0, %s51
      %s54 = sphi 0, %s53
      %s68 = sphi 0, %s54
      %s72 = sphi 0, %s72
      %s74 = sphi 0, %s72
      %s75 = sphi 0, %s74
      %s89 = sphi 0, %s75
      %s93 = sphi 0, %s93
      %s95 = sphi 0, %s93
      %s96 = sphi 0, %s95
      %s110 = sphi 0, %s96
      %s116 = sphi 0, %s118
      %s119 = sphi 0, %s116
      %s120 = sphi 0, %s119
      %s136 = sphi 0, %s120
    $region4: #{tpu_custom_call.1} parent=1 // loop_header_branch
      %20 = sbr.rel (%p18) target = $region8
    $region5: #{tpu_custom_call.1} parent=1 // loop_body
      %s22 = ssub.s32 %s17, 1
      %s23 = ssub.s32 %s17, 2
      %s24 = sadd.s32 %s17, 1
      %s25 = ssub.s32 %s17, %s24
      %p26 = scmp.eq.s32.totalorder %s25, 0
      %s28 = sadd.s32 %s27, 1
      %s29 = scalar_select %p26, %s27, %s28
      %p32 = pneg %p26
      %p33 = scmp.eq.s32.totalorder %s17, 1
      %p34 = por %p32, %p33
      %p35 = scmp.ne.s32.totalorder %s27, %s30
      %p36 = scmp.eq.s32.totalorder %s17, 0
      %p37 = por %p35, %p36
      %p38 = scmp.ne.s32.totalorder %s27, %s30
      %p39 = scmp.eq.s32.totalorder %s22, 1
      %p40 = por %p38, %p39
      %p41 = scmp.ne.s32.totalorder %s30, %s31
      %p42 = scmp.eq.s32.totalorder %s22, 0
      %p43 = por %p41, %p42
      %p44 = scmp.ne.s32.totalorder %s30, %s31
      %p45 = scmp.eq.s32.totalorder %s23, 1
      %p46 = por %p44, %p45
      %p48 = scmp.ne.s32.totalorder %s31, %s47
      %p49 = scmp.eq.s32.totalorder %s23, 0
      %p50 = por %p48, %p49
      %s52 = sadd.s32 %s51, 1
      %p55 = scmp.eq.s32.totalorder %s17, 1
      %p56 = scmp.ne.s32.totalorder %s51, %s53
      %p57 = scmp.eq.s32.totalorder %s17, 0
      %p58 = por %p56, %p57
      %p59 = scmp.ne.s32.totalorder %s51, %s53
      %p60 = scmp.eq.s32.totalorder %s22, 1
      %p61 = por %p59, %p60
      %p62 = scmp.ne.s32.totalorder %s53, %s54
      %p63 = scmp.eq.s32.totalorder %s22, 0
      %p64 = por %p62, %p63
      %p65 = scmp.ne.s32.totalorder %s53, %s54
      %p66 = scmp.eq.s32.totalorder %s23, 1
      %p67 = por %p65, %p66
      %p69 = scmp.ne.s32.totalorder %s54, %s68
      %p70 = scmp.eq.s32.totalorder %s23, 0
      %p71 = por %p69, %p70
      %s73 = sadd.s32 %s72, 1
      %p76 = scmp.eq.s32.totalorder %s17, 1
      %p77 = scmp.ne.s32.totalorder %s72, %s74
      %p78 = scmp.eq.s32.totalorder %s17, 0
      %p79 = por %p77, %p78
      %p80 = scmp.ne.s32.totalorder %s72, %s74
      %p81 = scmp.eq.s32.totalorder %s22, 1
      %p82 = por %p80, %p81
      %p83 = scmp.ne.s32.totalorder %s74, %s75
      %p84 = scmp.eq.s32.totalorder %s22, 0
      %p85 = por %p83, %p84
      %p86 = scmp.ne.s32.totalorder %s74, %s75
      %p87 = scmp.eq.s32.totalorder %s23, 1
      %p88 = por %p86, %p87
      %p90 = scmp.ne.s32.totalorder %s75, %s89
      %p91 = scmp.eq.s32.totalorder %s23, 0
      %p92 = por %p90, %p91
      %s94 = sadd.s32 %s93, 1
      %p97 = scmp.eq.s32.totalorder %s17, 1
      %p98 = scmp.ne.s32.totalorder %s93, %s95
      %p99 = scmp.eq.s32.totalorder %s17, 0
      %p100 = por %p98, %p99
      %p101 = scmp.ne.s32.totalorder %s93, %s95
      %p102 = scmp.eq.s32.totalorder %s22, 1
      %p103 = por %p101, %p102
      %p104 = scmp.ne.s32.totalorder %s95, %s96
      %p105 = scmp.eq.s32.totalorder %s22, 0
      %p106 = por %p104, %p105
      %p107 = scmp.ne.s32.totalorder %s95, %s96
      %p108 = scmp.eq.s32.totalorder %s23, 1
      %p109 = por %p107, %p108
      %p111 = scmp.ne.s32.totalorder %s96, %s110
      %p112 = scmp.eq.s32.totalorder %s23, 0
      %p113 = por %p111, %p112
      %s114 = ssub.s32 %s17, %s24
      %p115 = scmp.eq.s32.totalorder %s114, 0
      %s117 = sadd.s32 %s116, 1
      %s118 = scalar_select %p115, %s116, %s117
      %p121 = pneg %p115
      %p122 = scmp.eq.s32.totalorder %s17, 1
      %p123 = por %p121, %p122
      %p124 = scmp.ne.s32.totalorder %s116, %s119
      %p125 = scmp.eq.s32.totalorder %s17, 0
      %p126 = por %p124, %p125
      %p127 = scmp.ne.s32.totalorder %s116, %s119
      %p128 = scmp.eq.s32.totalorder %s22, 1
      %p129 = por %p127, %p128
      %p130 = scmp.ne.s32.totalorder %s119, %s120
      %p131 = scmp.eq.s32.totalorder %s22, 0
      %p132 = por %p130, %p131
      %p133 = scmp.ne.s32.totalorder %s119, %s120
      %p134 = scmp.eq.s32.totalorder %s23, 1
      %p135 = por %p133, %p134
      %p137 = scmp.ne.s32.totalorder %s120, %s136
      %p138 = scmp.eq.s32.totalorder %s23, 0
      %p139 = por %p137, %p138
      %p140 = scmp.le.s32.totalorder 1, %s17
      %p141 = scmp.lt.s32.totalorder %s17, 3
      %p142 = pnand %p140, %p141
      %p143 = pneg %p142
      // Predicated region
      $region9: #{tpu_custom_call.1} parent=5 // pred_check
        _
      $region10: #{tpu_custom_call.1} parent=5 // pred_check_branch
        %145 = sbr.rel (%p142) target = $region12
      $region11: #{tpu_custom_call.1} parent=5 // pred_region
        %s146 = ssub.s32 %s17, 1
        // Predicated region
        $region13: #{tpu_custom_call.1} parent=11 // pred_check
          %p147 = pneg %p64
        $region14: #{tpu_custom_call.1} parent=11 // pred_check_branch
          %149 = sbr.rel (%p147) target = $region16
        $region15: #{tpu_custom_call.1} parent=11 // pred_region
          _
        $region16: #{tpu_custom_call.1} parent=11 // pred_fallthru
          _
        // Predicated region
        $region17: #{tpu_custom_call.1} parent=11 // pred_check
          %p150 = pneg %p85
        $region18: #{tpu_custom_call.1} parent=11 // pred_check_branch
          %152 = sbr.rel (%p150) target = $region20
        $region19: #{tpu_custom_call.1} parent=11 // pred_region
          _
        $region20: #{tpu_custom_call.1} parent=11 // pred_fallthru
          _
        // Predicated region
        $region21: #{tpu_custom_call.1} parent=11 // pred_check
          %p153 = pneg %p106
        $region22: #{tpu_custom_call.1} parent=11 // pred_check_branch
          %155 = sbr.rel (%p153) target = $region24
        $region23: #{tpu_custom_call.1} parent=11 // pred_region
          %157 = vsyncadd [#allocation5], 0
          %s159 = sshll.u32 %s3, 4
          %s160 = int_to_ptr.vmem [resolvable:$true] %s159
          %162 = dma.vmem_to_smem %s160, 16, [#allocation6], [#allocation5]
        $region24: #{tpu_custom_call.1} parent=11 // pred_fallthru
          _
      $region12: #{tpu_custom_call.1} parent=5 // pred_fallthru
        _
      %p163 = scmp.lt.s32.totalorder %s17, 2
      // Predicated region
      $region25: #{tpu_custom_call.1} parent=5 // pred_check
        %p164 = pneg %p163
      $region26: #{tpu_custom_call.1} parent=5 // pred_check_branch
        %166 = sbr.rel (%p164) target = $region28
      $region27: #{tpu_custom_call.1} parent=5 // pred_region
        // Predicated region
        $region29: #{tpu_custom_call.1} parent=27 // pred_check
          %p167 = pneg %p37
        $region30: #{tpu_custom_call.1} parent=27 // pred_check_branch
          %169 = sbr.rel (%p167) target = $region32
        $region31: #{tpu_custom_call.1} parent=27 // pred_region
          %s170 = sand.u32 %s27, 1
          %s171 = scalar_lea.sflag [#allocation3], %s170
          %s172 = sand.u32 %s27, 1
          %s173 = smul.addr %s172, 64
          %s174 = scalar_lea.vmem [#allocation2], %s173
          %176 = vsyncadd %s171, 0
          %s177 = smul.addr %s17, 8
          %s178 = smul.addr %s177, 8
          %s179 = scalar_lea.hbm %s0, %s178
          %s180 = sshll.u32 %s179, 4
          %s181 = int_to_ptr.hbm [resolvable:$true] %s180
          %s182 = sshll.u32 %s174, 4
          %s183 = int_to_ptr.vmem [resolvable:$true] %s182
          %188 = dma.hbm_to_vmem [thread:$0]  %s181, 1024, %s183, %s171, 256, 256, 16
        $region32: #{tpu_custom_call.1} parent=27 // pred_fallthru
          _
      $region28: #{tpu_custom_call.1} parent=5 // pred_fallthru
        _
      %p189 = scmp.le.s32.totalorder 1, %s17
      %p190 = scmp.lt.s32.totalorder %s17, 3
      %p191 = pnand %p189, %p190
      %p192 = pneg %p191
      // Predicated region
      $region33: #{tpu_custom_call.1} parent=5 // pred_check
        _
      $region34: #{tpu_custom_call.1} parent=5 // pred_check_branch
        %194 = sbr.rel (%p191) target = $region36
      $region35: #{tpu_custom_call.1} parent=5 // pred_region
        %s195 = ssub.s32 %s17, 1
        %s196 = sand.u32 %s30, 1
        %s197 = scalar_lea.sflag [#allocation3], %s196
        %s198 = sand.u32 %s30, 1
        %s199 = smul.addr %s198, 64
        %s200 = scalar_lea.vmem [#allocation2], %s199
        // Predicated region
        $region37: #{tpu_custom_call.1} parent=35 // pred_check
          %p201 = pneg %p43
        $region38: #{tpu_custom_call.1} parent=35 // pred_check_branch
          %203 = sbr.rel (%p201) target = $region40
        $region39: #{tpu_custom_call.1} parent=35 // pred_region
          %205 = dma.done %s197, 1024
        $region40: #{tpu_custom_call.1} parent=35 // pred_fallthru
          _
        // Predicated region
        $region41: #{tpu_custom_call.1} parent=35 // pred_check
          %p206 = pneg %p106
        $region42: #{tpu_custom_call.1} parent=35 // pred_check_branch
          %208 = sbr.rel (%p206) target = $region44
        $region43: #{tpu_custom_call.1} parent=35 // pred_region
          %210 = dma.done [#allocation5], 16
        $region44: #{tpu_custom_call.1} parent=35 // pred_fallthru
          _
        %211 = sfence
        %s212 = sand.u32 %s30, 1
        %s213 = scalar_lea.sflag [#allocation3], %s212
        %s214 = sand.u32 %s30, 1
        %s215 = smul.addr %s214, 64
        %s216 = scalar_lea.vmem [#allocation2], %s215
        %p217 = pneg %p43
        %p218 = pneg %p40
        %p219 = pneg %p64
        %p220 = pneg %p61
        %p221 = pneg %p85
        %p222 = pneg %p82
        %p223 = pneg %p106
        %p224 = pneg %p103
        %p225 = pneg %p132
        %p226 = pneg %p129
        %s227 = sand.u32 %s119, 1
        %s228 = scalar_lea.sflag [#allocation4], %s227
        %s229 = sand.u32 %s119, 1
        %s230 = smul.addr %s229, 64
        %s231 = scalar_lea.vmem [#allocation7], %s230
        %v232 = vld [vmem:[%s200] sm:$0xff]
        %v233 = vld [vmem:[%s200 + $0x8] sm:$0xff]
        %v234 = vld [vmem:[%s200 + $0x10] sm:$0xff]
        %v235 = vld [vmem:[%s200 + $0x18] sm:$0xff]
        %v236 = vld [vmem:[%s200 + $0x20] sm:$0xff]
        %v237 = vld [vmem:[%s200 + $0x28] sm:$0xff]
        %v238 = vld [vmem:[%s200 + $0x30] sm:$0xff]
        %v239 = vld [vmem:[%s200 + $0x38] sm:$0xff]
        %v240 = vld [vmem:[%s1] sm:$0xff]
        %v241 = vld [vmem:[%s1 + $0x8] sm:$0xff]
        %v242 = vld [vmem:[%s1 + $0x10] sm:$0xff]
        %v243 = vld [vmem:[%s1 + $0x18] sm:$0xff]
        %v244 = vld [vmem:[%s2] sm:$0xff]
        %v245 = vld [vmem:[%s2 + $0x8] sm:$0xff]
        %v246 = vld [vmem:[%s2 + $0x10] sm:$0xff]
        %v247 = vld [vmem:[%s2 + $0x18] sm:$0xff]
        %v248 = vadd.f32 %v232, %v233
        %249 = vadd.xlane.f32.xlu0 %v248
        %v250 = vpop.xlane.xlu0 %249
        %v251 = vadd.f32 %v234, %v235
        %252 = vadd.xlane.f32.xlu0 %v251
        %v253 = vpop.xlane.xlu0 %252
        %v254 = vadd.f32 %v236, %v237
        %255 = vadd.xlane.f32.xlu0 %v254
        %v256 = vpop.xlane.xlu0 %255
        %v257 = vadd.f32 %v238, %v239
        %258 = vadd.xlane.f32.xlu0 %v257
        %v259 = vpop.xlane.xlu0 %258
        %v260 = vrcp.pop 256.0
        %v261 = vmul.f32 256.0, %v260
        %v262 = vsub.f32 1.0, %v261
        %v263 = vmul.f32 %v260, %v262
        %v264 = vadd.f32 %v260, %v263
        %vm265 = vweird.f32 %v260
        %v266 = vsel %vm265, %v260, %v264
        %v267 = vmul.f32 %v250, %v266
        %v268 = vmul.f32 %v253, %v266
        %v269 = vmul.f32 %v256, %v266
        %v270 = vmul.f32 %v259, %v266
        %v271 = vmax.f32 %v232, %v233
        %272 = vmax.xlane.f32.xlu0 %v271
        %v273 = vpop.xlane.xlu0 %272
        %v274 = vmax.f32 %v234, %v235
        %275 = vmax.xlane.f32.xlu0 %v274
        %v276 = vpop.xlane.xlu0 %275
        %v277 = vmax.f32 %v236, %v237
        %278 = vmax.xlane.f32.xlu0 %v277
        %v279 = vpop.xlane.xlu0 %278
        %v280 = vmax.f32 %v238, %v239
        %281 = vmax.xlane.f32.xlu0 %v280
        %v282 = vpop.xlane.xlu0 %281
        %v283 = vmul.f32 %v240, %v267
        %v284 = vmul.f32 %v241, %v268
        %v285 = vmul.f32 %v242, %v269
        %v286 = vmul.f32 %v243, %v270
        %vm287 = vcmask 15360
        %v288 = vsel %vm287, %v283, 0.0
        %v289 = vsel %vm287, %v284, 0.0
        %v290 = vadd.f32 %v288, %v289
        %v291 = vsel %vm287, %v285, 0.0
        %v292 = vadd.f32 %v290, %v291
        %v293 = vsel %vm287, %v286, 0.0
        %v294 = vadd.f32 %v292, %v293
        %v295 = vrot.slane %v294, 4
        %v296 = vadd.f32 %v294, %v295
        %v297 = vrot.slane %v296, 2
        %v298 = vadd.f32 %v296, %v297
        %v299 = vrot.slane %v298, 1
        %v300 = vadd.f32 %v298, %v299
        %v301 = vmax.f32 %v300, 0.0
        %v302 = vmul.f32 %v240, %v273
        %v303 = vmul.f32 %v241, %v276
        %v304 = vmul.f32 %v242, %v279
        %v305 = vmul.f32 %v243, %v282
        %v306 = vsel %vm287, %v302, 0.0
        %v307 = vsel %vm287, %v303, 0.0
        %v308 = vadd.f32 %v306, %v307
        %v309 = vsel %vm287, %v304, 0.0
        %v310 = vadd.f32 %v308, %v309
        %v311 = vsel %vm287, %v305, 0.0
        %v312 = vadd.f32 %v310, %v311
        %v313 = vrot.slane %v312, 4
        %v314 = vadd.f32 %v312, %v313
        %v315 = vrot.slane %v314, 2
        %v316 = vadd.f32 %v314, %v315
        %v317 = vrot.slane %v316, 1
        %v318 = vadd.f32 %v316, %v317
        %v319 = vmax.f32 %v318, 0.0
        %v320 = vmul.f32 %v244, %v301
        %v321 = vmul.f32 %v245, %v301
        %v322 = vmul.f32 %v246, %v301
        %v323 = vmul.f32 %v247, %v301
        %v324 = vsel %vm287, %v320, 0.0
        %325 = vadd.xlane.f32.xlu0 %v324
        %v326 = vpop.xlane.xlu0 %325
        %v327 = vsel %vm287, %v321, 0.0
        %328 = vadd.xlane.f32.xlu0 %v327
        %v329 = vpop.xlane.xlu0 %328
        %v330 = vsel %vm287, %v322, 0.0
        %331 = vadd.xlane.f32.xlu0 %v330
        %v332 = vpop.xlane.xlu0 %331
        %v333 = vsel %vm287, %v323, 0.0
        %334 = vadd.xlane.f32.xlu0 %v333
        %v335 = vpop.xlane.xlu0 %334
        %v336 = vmul.f32 %v244, %v319
        %v337 = vmul.f32 %v245, %v319
        %v338 = vmul.f32 %v246, %v319
        %v339 = vmul.f32 %v247, %v319
        %v340 = vsel %vm287, %v336, 0.0
        %341 = vadd.xlane.f32.xlu0 %v340
        %v342 = vpop.xlane.xlu0 %341
        %v343 = vsel %vm287, %v337, 0.0
        %344 = vadd.xlane.f32.xlu0 %v343
        %v345 = vpop.xlane.xlu0 %344
        %v346 = vsel %vm287, %v338, 0.0
        %347 = vadd.xlane.f32.xlu0 %v346
        %v348 = vpop.xlane.xlu0 %347
        %v349 = vsel %vm287, %v339, 0.0
        %350 = vadd.xlane.f32.xlu0 %v349
        %v351 = vpop.xlane.xlu0 %350
        %v352 = vadd.f32 %v326, %v342
        %v353 = vadd.f32 %v329, %v345
        %v354 = vadd.f32 %v332, %v348
        %v355 = vadd.f32 %v335, %v351
        %v356 = vxor.u32 %v352, 2147483648
        %v357 = vxor.u32 %v353, 2147483648
        %v358 = vxor.u32 %v354, 2147483648
        %v359 = vxor.u32 %v355, 2147483648
        %v360 = vmul.f32 %v356, 1.442695
        %v361 = vpow.pop %v360
        %v362 = vmul.f32 %v357, 1.442695
        %v363 = vpow.pop %v362
        %v364 = vmul.f32 %v358, 1.442695
        %v365 = vpow.pop %v364
        %v366 = vmul.f32 %v359, 1.442695
        %v367 = vpow.pop %v366
        %v368 = vadd.f32 %v361, 1.0
        %v369 = vadd.f32 %v363, 1.0
        %v370 = vadd.f32 %v365, 1.0
        %v371 = vadd.f32 %v367, 1.0
        %v372 = vrcp.pop %v368
        %v373 = vmul.f32 %v368, %v372
        %v374 = vsub.f32 1.0, %v373
        %v375 = vmul.f32 %v372, %v374
        %v376 = vadd.f32 %v372, %v375
        %vm377 = vweird.f32 %v368
        %vm378 = vweird.f32 %v372
        %vm379 = vmor %vm377, %vm378
        %v380 = vsel %vm379, %v372, %v376
        %v381 = vand.u32 2147483647, %v368
        %vm382 = vcmp.eq.f32.partialorder %v381, 8.507059e+37
        %v383 = vand.u32 %v368, 2147483648
        %v384 = vor.u32 1.1754944e-38, %v383
        %v385 = vsel %vm382, %v384, %v380
        %v386 = vmul.f32 1.0, %v385
        %v387 = vrcp.pop %v369
        %v388 = vmul.f32 %v369, %v387
        %v389 = vsub.f32 1.0, %v388
        %v390 = vmul.f32 %v387, %v389
        %v391 = vadd.f32 %v387, %v390
        %vm392 = vweird.f32 %v369
        %vm393 = vweird.f32 %v387
        %vm394 = vmor %vm392, %vm393
        %v395 = vsel %vm394, %v387, %v391
        %v396 = vand.u32 2147483647, %v369
        %vm397 = vcmp.eq.f32.partialorder %v396, 8.507059e+37
        %v398 = vand.u32 %v369, 2147483648
        %v399 = vor.u32 1.1754944e-38, %v398
        %v400 = vsel %vm397, %v399, %v395
        %v401 = vmul.f32 1.0, %v400
        %v402 = vrcp.pop %v370
        %v403 = vmul.f32 %v370, %v402
        %v404 = vsub.f32 1.0, %v403
        %v405 = vmul.f32 %v402, %v404
        %v406 = vadd.f32 %v402, %v405
        %vm407 = vweird.f32 %v370
        %vm408 = vweird.f32 %v402
        %vm409 = vmor %vm407, %vm408
        %v410 = vsel %vm409, %v402, %v406
        %v411 = vand.u32 2147483647, %v370
        %vm412 = vcmp.eq.f32.partialorder %v411, 8.507059e+37
        %v413 = vand.u32 %v370, 2147483648
        %v414 = vor.u32 1.1754944e-38, %v413
        %v415 = vsel %vm412, %v414, %v410
        %v416 = vmul.f32 1.0, %v415
        %v417 = vrcp.pop %v371
        %v418 = vmul.f32 %v371, %v417
        %v419 = vsub.f32 1.0, %v418
        %v420 = vmul.f32 %v417, %v419
        %v421 = vadd.f32 %v417, %v420
        %vm422 = vweird.f32 %v371
        %vm423 = vweird.f32 %v417
        %vm424 = vmor %vm422, %vm423
        %v425 = vsel %vm424, %v417, %v421
        %v426 = vand.u32 2147483647, %v371
        %vm427 = vcmp.eq.f32.partialorder %v426, 8.507059e+37
        %v428 = vand.u32 %v371, 2147483648
        %v429 = vor.u32 1.1754944e-38, %v428
        %v430 = vsel %vm427, %v429, %v425
        %v431 = vmul.f32 1.0, %v430
        %v432 = vmul.f32 %v386, %v232
        %v433 = vmul.f32 %v386, %v233
        %v434 = vmul.f32 %v401, %v234
        %v435 = vmul.f32 %v401, %v235
        %v436 = vmul.f32 %v416, %v236
        %v437 = vmul.f32 %v416, %v237
        %v438 = vmul.f32 %v431, %v238
        %v439 = vmul.f32 %v431, %v239
        %v440 = vadd.f32 %v432, %v434
        %v441 = vadd.f32 %v440, %v436
        %v442 = vadd.f32 %v441, %v438
        %v443 = vrot.slane %v442, 4
        %v444 = vadd.f32 %v442, %v443
        %v445 = vrot.slane %v444, 2
        %v446 = vadd.f32 %v444, %v445
        %v447 = vrot.slane %v446, 1
        %v448 = vadd.f32 %v446, %v447
        %v449 = vadd.f32 %v433, %v435
        %v450 = vadd.f32 %v449, %v437
        %v451 = vadd.f32 %v450, %v439
        %v452 = vrot.slane %v451, 4
        %v453 = vadd.f32 %v451, %v452
        %v454 = vrot.slane %v453, 2
        %v455 = vadd.f32 %v453, %v454
        %v456 = vrot.slane %v455, 1
        %v457 = vadd.f32 %v455, %v456
        %v458 = vrcp.pop 32.0
        %v459 = vmul.f32 32.0, %v458
        %v460 = vsub.f32 1.0, %v459
        %v461 = vmul.f32 %v458, %v460
        %v462 = vadd.f32 %v458, %v461
        %vm463 = vweird.f32 %v458
        %v464 = vsel %vm463, %v458, %v462
        %v465 = vmul.f32 %v448, %v464
        %v466 = vmul.f32 %v457, %v464
        %v467 = vmax.f32 %v432, %v436
        %v468 = vmax.f32 %v434, %v438
        %v469 = vmax.f32 %v467, %v468
        %v470 = vrot.slane %v469, 4
        %v471 = vmax.f32 %v469, %v470
        %v472 = vrot.slane %v471, 2
        %v473 = vmax.f32 %v471, %v472
        %v474 = vrot.slane %v473, 1
        %v475 = vmax.f32 %v473, %v474
        %v476 = vmax.f32 %v433, %v437
        %v477 = vmax.f32 %v435, %v439
        %v478 = vmax.f32 %v476, %v477
        %v479 = vrot.slane %v478, 4
        %v480 = vmax.f32 %v478, %v479
        %v481 = vrot.slane %v480, 2
        %v482 = vmax.f32 %v480, %v481
        %v483 = vrot.slane %v482, 1
        %v484 = vmax.f32 %v482, %v483
        %v485 = vlaneseq
        %v486 = vand.u32 %v485, 127
        %v487 = vadd.s32 %v486, 128
        %v488 = vshra.s32 %v486, 4
        %v489 = vshra.s32 %v487, 4
        %v490 = vand.u32 %v486, 15
        %v491 = vand.u32 %v487, 15
        %vm492 = vcmp.ge.s32.totalorder %v488, 3
        %vm493 = vcmp.ge.s32.totalorder %v489, 3
        %vm494 = vcmp.ge.s32.totalorder %v488, 2
        %vm495 = vcmp.ge.s32.totalorder %v489, 2
        %vm496 = vcmp.ge.s32.totalorder %v488, 1
        %vm497 = vcmp.ge.s32.totalorder %v489, 1
        %vm498 = vcmp.lt.s32.totalorder %v488, 15
        %vm499 = vcmp.lt.s32.totalorder %v489, 15
        %vm500 = vcmp.lt.s32.totalorder %v488, 14
        %vm501 = vcmp.lt.s32.totalorder %v489, 14
        %vm502 = vcmp.lt.s32.totalorder %v488, 13
        %vm503 = vcmp.lt.s32.totalorder %v489, 13
        %vm504 = vcmp.ge.s32.totalorder %v490, 3
        %vm505 = vcmp.ge.s32.totalorder %v491, 3
        %vm506 = vcmp.ge.s32.totalorder %v490, 2
        %vm507 = vcmp.ge.s32.totalorder %v491, 2
        %vm508 = vcmp.ge.s32.totalorder %v490, 1
        %vm509 = vcmp.ge.s32.totalorder %v491, 1
        %vm510 = vcmp.lt.s32.totalorder %v490, 15
        %vm511 = vcmp.lt.s32.totalorder %v491, 15
        %vm512 = vcmp.lt.s32.totalorder %v490, 14
        %vm513 = vcmp.lt.s32.totalorder %v491, 14
        %vm514 = vcmp.lt.s32.totalorder %v490, 13
        %vm515 = vcmp.lt.s32.totalorder %v491, 13
        %s516 = sld [smem:[#allocation6]]
        %s517 = sld [smem:[#allocation6 + $0x31]]
        %v518 = vstv %s516
        %v519 = vmul.f32 %v518, %v465
        %v520 = vmul.f32 %v518, %v466
        %v521 = vstv %s517
        %v522 = vmul.f32 %v521, %v475
        %v523 = vmul.f32 %v521, %v484
        %v524 = vadd.f32 %v519, %v522
        %v525 = vadd.f32 %v520, %v523
        %526 = vrot.lane.b32.xlu0 %v524, 51
        %v527 = vpop.permute.xlu0 %526
        %528 = vrot.lane.b32.xlu0 %v525, 51
        %v529 = vpop.permute.xlu0 %528
        %vm530 = vcmp.lt.s32.totalorder %v486, 51
        %v531 = vsel %vm530, %v527, %v529
        %v532 = vsel %vm530, %v529, %v527
        %vm533 = vmand %vm492, %vm504
        %vm534 = vmand %vm493, %vm505
        %v535 = vsel %vm533, %v532, 0.0
        %v536 = vsel %vm534, %v531, 0.0
        %v537 = vadd.f32 %v535, 0.0
        %v538 = vadd.f32 %v536, 0.0
        %s539 = sld [smem:[#allocation6 + $0x1]]
        %s540 = sld [smem:[#allocation6 + $0x32]]
        %v541 = vstv %s539
        %v542 = vmul.f32 %v541, %v465
        %v543 = vmul.f32 %v541, %v466
        %v544 = vstv %s540
        %v545 = vmul.f32 %v544, %v475
        %v546 = vmul.f32 %v544, %v484
        %v547 = vadd.f32 %v542, %v545
        %v548 = vadd.f32 %v543, %v546
        %549 = vrot.lane.b32.xlu0 %v547, 50
        %v550 = vpop.permute.xlu0 %549
        %551 = vrot.lane.b32.xlu0 %v548, 50
        %v552 = vpop.permute.xlu0 %551
        %vm553 = vcmp.lt.s32.totalorder %v486, 50
        %v554 = vsel %vm553, %v550, %v552
        %v555 = vsel %vm553, %v552, %v550
        %vm556 = vmand %vm492, %vm506
        %vm557 = vmand %vm493, %vm507
        %v558 = vsel %vm556, %v555, 0.0
        %v559 = vsel %vm557, %v554, 0.0
        %v560 = vadd.f32 %v537, %v558
        %v561 = vadd.f32 %v538, %v559
        %s562 = sld [smem:[#allocation6 + $0x2]]
        %s563 = sld [smem:[#allocation6 + $0x33]]
        %v564 = vstv %s562
        %v565 = vmul.f32 %v564, %v465
        %v566 = vmul.f32 %v564, %v466
        %v567 = vstv %s563
        %v568 = vmul.f32 %v567, %v475
        %v569 = vmul.f32 %v567, %v484
        %v570 = vadd.f32 %v565, %v568
        %v571 = vadd.f32 %v566, %v569
        %572 = vrot.lane.b32.xlu0 %v570, 49
        %v573 = vpop.permute.xlu0 %572
        %574 = vrot.lane.b32.xlu0 %v571, 49
        %v575 = vpop.permute.xlu0 %574
        %vm576 = vcmp.lt.s32.totalorder %v486, 49
        %v577 = vsel %vm576, %v573, %v575
        %v578 = vsel %vm576, %v575, %v573
        %vm579 = vmand %vm492, %vm508
        %vm580 = vmand %vm493, %vm509
        %v581 = vsel %vm579, %v578, 0.0
        %v582 = vsel %vm580, %v577, 0.0
        %v583 = vadd.f32 %v560, %v581
        %v584 = vadd.f32 %v561, %v582
        %s585 = sld [smem:[#allocation6 + $0x3]]
        %s586 = sld [smem:[#allocation6 + $0x34]]
        %v587 = vstv %s585
        %v588 = vmul.f32 %v587, %v465
        %v589 = vmul.f32 %v587, %v466
        %v590 = vstv %s586
        %v591 = vmul.f32 %v590, %v475
        %v592 = vmul.f32 %v590, %v484
        %v593 = vadd.f32 %v588, %v591
        %v594 = vadd.f32 %v589, %v592
        %595 = vrot.lane.b32.xlu0 %v593, 48
        %v596 = vpop.permute.xlu0 %595
        %597 = vrot.lane.b32.xlu0 %v594, 48
        %v598 = vpop.permute.xlu0 %597
        %vm599 = vcmp.lt.s32.totalorder %v486, 48
        %v600 = vsel %vm599, %v596, %v598
        %v601 = vsel %vm599, %v598, %v596
        %v602 = vsel %vm492, %v601, 0.0
        %v603 = vsel %vm493, %v600, 0.0
        %v604 = vadd.f32 %v583, %v602
        %v605 = vadd.f32 %v584, %v603
        %s606 = sld [smem:[#allocation6 + $0x4]]
        %s607 = sld [smem:[#allocation6 + $0x35]]
        %v608 = vstv %s606
        %v609 = vmul.f32 %v608, %v465
        %v610 = vmul.f32 %v608, %v466
        %v611 = vstv %s607
        %v612 = vmul.f32 %v611, %v475
        %v613 = vmul.f32 %v611, %v484
        %v614 = vadd.f32 %v609, %v612
        %v615 = vadd.f32 %v610, %v613
        %616 = vrot.lane.b32.xlu0 %v614, 47
        %v617 = vpop.permute.xlu0 %616
        %618 = vrot.lane.b32.xlu0 %v615, 47
        %v619 = vpop.permute.xlu0 %618
        %vm620 = vcmp.lt.s32.totalorder %v486, 47
        %v621 = vsel %vm620, %v617, %v619
        %v622 = vsel %vm620, %v619, %v617
        %vm623 = vmand %vm492, %vm510
        %vm624 = vmand %vm493, %vm511
        %v625 = vsel %vm623, %v622, 0.0
        %v626 = vsel %vm624, %v621, 0.0
        %v627 = vadd.f32 %v604, %v625
        %v628 = vadd.f32 %v605, %v626
        %s629 = sld [smem:[#allocation6 + $0x5]]
        %s630 = sld [smem:[#allocation6 + $0x36]]
        %v631 = vstv %s629
        %v632 = vmul.f32 %v631, %v465
        %v633 = vmul.f32 %v631, %v466
        %v634 = vstv %s630
        %v635 = vmul.f32 %v634, %v475
        %v636 = vmul.f32 %v634, %v484
        %v637 = vadd.f32 %v632, %v635
        %v638 = vadd.f32 %v633, %v636
        %639 = vrot.lane.b32.xlu0 %v637, 46
        %v640 = vpop.permute.xlu0 %639
        %641 = vrot.lane.b32.xlu0 %v638, 46
        %v642 = vpop.permute.xlu0 %641
        %vm643 = vcmp.lt.s32.totalorder %v486, 46
        %v644 = vsel %vm643, %v640, %v642
        %v645 = vsel %vm643, %v642, %v640
        %vm646 = vmand %vm492, %vm512
        %vm647 = vmand %vm493, %vm513
        %v648 = vsel %vm646, %v645, 0.0
        %v649 = vsel %vm647, %v644, 0.0
        %v650 = vadd.f32 %v627, %v648
        %v651 = vadd.f32 %v628, %v649
        %s652 = sld [smem:[#allocation6 + $0x6]]
        %s653 = sld [smem:[#allocation6 + $0x37]]
        %v654 = vstv %s652
        %v655 = vmul.f32 %v654, %v465
        %v656 = vmul.f32 %v654, %v466
        %v657 = vstv %s653
        %v658 = vmul.f32 %v657, %v475
        %v659 = vmul.f32 %v657, %v484
        %v660 = vadd.f32 %v655, %v658
        %v661 = vadd.f32 %v656, %v659
        %662 = vrot.lane.b32.xlu0 %v660, 45
        %v663 = vpop.permute.xlu0 %662
        %664 = vrot.lane.b32.xlu0 %v661, 45
        %v665 = vpop.permute.xlu0 %664
        %vm666 = vcmp.lt.s32.totalorder %v486, 45
        %v667 = vsel %vm666, %v663, %v665
        %v668 = vsel %vm666, %v665, %v663
        %vm669 = vmand %vm492, %vm514
        %vm670 = vmand %vm493, %vm515
        %v671 = vsel %vm669, %v668, 0.0
        %v672 = vsel %vm670, %v667, 0.0
        %v673 = vadd.f32 %v650, %v671
        %v674 = vadd.f32 %v651, %v672
        %s675 = sld [smem:[#allocation6 + $0x7]]
        %s676 = sld [smem:[#allocation6 + $0x38]]
        %v677 = vstv %s675
        %v678 = vmul.f32 %v677, %v465
        %v679 = vmul.f32 %v677, %v466
        %v680 = vstv %s676
        %v681 = vmul.f32 %v680, %v475
        %v682 = vmul.f32 %v680, %v484
        %v683 = vadd.f32 %v678, %v681
        %v684 = vadd.f32 %v679, %v682
        %685 = vrot.lane.b32.xlu0 %v683, 35
        %v686 = vpop.permute.xlu0 %685
        %687 = vrot.lane.b32.xlu0 %v684, 35
        %v688 = vpop.permute.xlu0 %687
        %vm689 = vcmp.lt.s32.totalorder %v486, 35
        %v690 = vsel %vm689, %v686, %v688
        %v691 = vsel %vm689, %v688, %v686
        %vm692 = vmand %vm494, %vm504
        %vm693 = vmand %vm495, %vm505
        %v694 = vsel %vm692, %v691, 0.0
        %v695 = vsel %vm693, %v690, 0.0
        %v696 = vadd.f32 %v673, %v694
        %v697 = vadd.f32 %v674, %v695
        %s698 = sld [smem:[#allocation6 + $0x8]]
        %s699 = sld [smem:[#allocation6 + $0x39]]
        %v700 = vstv %s698
        %v701 = vmul.f32 %v700, %v465
        %v702 = vmul.f32 %v700, %v466
        %v703 = vstv %s699
        %v704 = vmul.f32 %v703, %v475
        %v705 = vmul.f32 %v703, %v484
        %v706 = vadd.f32 %v701, %v704
        %v707 = vadd.f32 %v702, %v705
        %708 = vrot.lane.b32.xlu0 %v706, 34
        %v709 = vpop.permute.xlu0 %708
        %710 = vrot.lane.b32.xlu0 %v707, 34
        %v711 = vpop.permute.xlu0 %710
        %vm712 = vcmp.lt.s32.totalorder %v486, 34
        %v713 = vsel %vm712, %v709, %v711
        %v714 = vsel %vm712, %v711, %v709
        %vm715 = vmand %vm494, %vm506
        %vm716 = vmand %vm495, %vm507
        %v717 = vsel %vm715, %v714, 0.0
        %v718 = vsel %vm716, %v713, 0.0
        %v719 = vadd.f32 %v696, %v717
        %v720 = vadd.f32 %v697, %v718
        %s721 = sld [smem:[#allocation6 + $0x9]]
        %s722 = sld [smem:[#allocation6 + $0x3a]]
        %v723 = vstv %s721
        %v724 = vmul.f32 %v723, %v465
        %v725 = vmul.f32 %v723, %v466
        %v726 = vstv %s722
        %v727 = vmul.f32 %v726, %v475
        %v728 = vmul.f32 %v726, %v484
        %v729 = vadd.f32 %v724, %v727
        %v730 = vadd.f32 %v725, %v728
        %731 = vrot.lane.b32.xlu0 %v729, 33
        %v732 = vpop.permute.xlu0 %731
        %733 = vrot.lane.b32.xlu0 %v730, 33
        %v734 = vpop.permute.xlu0 %733
        %vm735 = vcmp.lt.s32.totalorder %v486, 33
        %v736 = vsel %vm735, %v732, %v734
        %v737 = vsel %vm735, %v734, %v732
        %vm738 = vmand %vm494, %vm508
        %vm739 = vmand %vm495, %vm509
        %v740 = vsel %vm738, %v737, 0.0
        %v741 = vsel %vm739, %v736, 0.0
        %v742 = vadd.f32 %v719, %v740
        %v743 = vadd.f32 %v720, %v741
        %s744 = sld [smem:[#allocation6 + $0xa]]
        %s745 = sld [smem:[#allocation6 + $0x3b]]
        %v746 = vstv %s744
        %v747 = vmul.f32 %v746, %v465
        %v748 = vmul.f32 %v746, %v466
        %v749 = vstv %s745
        %v750 = vmul.f32 %v749, %v475
        %v751 = vmul.f32 %v749, %v484
        %v752 = vadd.f32 %v747, %v750
        %v753 = vadd.f32 %v748, %v751
        %754 = vrot.lane.b32.xlu0 %v752, 32
        %v755 = vpop.permute.xlu0 %754
        %756 = vrot.lane.b32.xlu0 %v753, 32
        %v757 = vpop.permute.xlu0 %756
        %vm758 = vcmp.lt.s32.totalorder %v486, 32
        %v759 = vsel %vm758, %v755, %v757
        %v760 = vsel %vm758, %v757, %v755
        %v761 = vsel %vm494, %v760, 0.0
        %v762 = vsel %vm495, %v759, 0.0
        %v763 = vadd.f32 %v742, %v761
        %v764 = vadd.f32 %v743, %v762
        %s765 = sld [smem:[#allocation6 + $0xb]]
        %s766 = sld [smem:[#allocation6 + $0x3c]]
        %v767 = vstv %s765
        %v768 = vmul.f32 %v767, %v465
        %v769 = vmul.f32 %v767, %v466
        %v770 = vstv %s766
        %v771 = vmul.f32 %v770, %v475
        %v772 = vmul.f32 %v770, %v484
        %v773 = vadd.f32 %v768, %v771
        %v774 = vadd.f32 %v769, %v772
        %775 = vrot.lane.b32.xlu0 %v773, 31
        %v776 = vpop.permute.xlu0 %775
        %777 = vrot.lane.b32.xlu0 %v774, 31
        %v778 = vpop.permute.xlu0 %777
        %vm779 = vcmp.lt.s32.totalorder %v486, 31
        %v780 = vsel %vm779, %v776, %v778
        %v781 = vsel %vm779, %v778, %v776
        %vm782 = vmand %vm494, %vm510
        %vm783 = vmand %vm495, %vm511
        %v784 = vsel %vm782, %v781, 0.0
        %v785 = vsel %vm783, %v780, 0.0
        %v786 = vadd.f32 %v763, %v784
        %v787 = vadd.f32 %v764, %v785
        %s788 = sld [smem:[#allocation6 + $0xc]]
        %s789 = sld [smem:[#allocation6 + $0x3d]]
        %v790 = vstv %s788
        %v791 = vmul.f32 %v790, %v465
        %v792 = vmul.f32 %v790, %v466
        %v793 = vstv %s789
        %v794 = vmul.f32 %v793, %v475
        %v795 = vmul.f32 %v793, %v484
        %v796 = vadd.f32 %v791, %v794
        %v797 = vadd.f32 %v792, %v795
        %798 = vrot.lane.b32.xlu0 %v796, 30
        %v799 = vpop.permute.xlu0 %798
        %800 = vrot.lane.b32.xlu0 %v797, 30
        %v801 = vpop.permute.xlu0 %800
        %vm802 = vcmp.lt.s32.totalorder %v486, 30
        %v803 = vsel %vm802, %v799, %v801
        %v804 = vsel %vm802, %v801, %v799
        %vm805 = vmand %vm494, %vm512
        %vm806 = vmand %vm495, %vm513
        %v807 = vsel %vm805, %v804, 0.0
        %v808 = vsel %vm806, %v803, 0.0
        %v809 = vadd.f32 %v786, %v807
        %v810 = vadd.f32 %v787, %v808
        %s811 = sld [smem:[#allocation6 + $0xd]]
        %s812 = sld [smem:[#allocation6 + $0x3e]]
        %v813 = vstv %s811
        %v814 = vmul.f32 %v813, %v465
        %v815 = vmul.f32 %v813, %v466
        %v816 = vstv %s812
        %v817 = vmul.f32 %v816, %v475
        %v818 = vmul.f32 %v816, %v484
        %v819 = vadd.f32 %v814, %v817
        %v820 = vadd.f32 %v815, %v818
        %821 = vrot.lane.b32.xlu0 %v819, 29
        %v822 = vpop.permute.xlu0 %821
        %823 = vrot.lane.b32.xlu0 %v820, 29
        %v824 = vpop.permute.xlu0 %823
        %vm825 = vcmp.lt.s32.totalorder %v486, 29
        %v826 = vsel %vm825, %v822, %v824
        %v827 = vsel %vm825, %v824, %v822
        %vm828 = vmand %vm494, %vm514
        %vm829 = vmand %vm495, %vm515
        %v830 = vsel %vm828, %v827, 0.0
        %v831 = vsel %vm829, %v826, 0.0
        %v832 = vadd.f32 %v809, %v830
        %v833 = vadd.f32 %v810, %v831
        %s834 = sld [smem:[#allocation6 + $0xe]]
        %s835 = sld [smem:[#allocation6 + $0x3f]]
        %v836 = vstv %s834
        %v837 = vmul.f32 %v836, %v465
        %v838 = vmul.f32 %v836, %v466
        %v839 = vstv %s835
        %v840 = vmul.f32 %v839, %v475
        %v841 = vmul.f32 %v839, %v484
        %v842 = vadd.f32 %v837, %v840
        %v843 = vadd.f32 %v838, %v841
        %844 = vrot.lane.b32.xlu0 %v842, 19
        %v845 = vpop.permute.xlu0 %844
        %846 = vrot.lane.b32.xlu0 %v843, 19
        %v847 = vpop.permute.xlu0 %846
        %vm848 = vcmp.lt.s32.totalorder %v486, 19
        %v849 = vsel %vm848, %v845, %v847
        %v850 = vsel %vm848, %v847, %v845
        %vm851 = vmand %vm496, %vm504
        %vm852 = vmand %vm497, %vm505
        %v853 = vsel %vm851, %v850, 0.0
        %v854 = vsel %vm852, %v849, 0.0
        %v855 = vadd.f32 %v832, %v853
        %v856 = vadd.f32 %v833, %v854
        %s857 = sld [smem:[#allocation6 + $0xf]]
        %s858 = sld [smem:[#allocation6 + $0x40]]
        %v859 = vstv %s857
        %v860 = vmul.f32 %v859, %v465
        %v861 = vmul.f32 %v859, %v466
        %v862 = vstv %s858
        %v863 = vmul.f32 %v862, %v475
        %v864 = vmul.f32 %v862, %v484
        %v865 = vadd.f32 %v860, %v863
        %v866 = vadd.f32 %v861, %v864
        %867 = vrot.lane.b32.xlu0 %v865, 18
        %v868 = vpop.permute.xlu0 %867
        %869 = vrot.lane.b32.xlu0 %v866, 18
        %v870 = vpop.permute.xlu0 %869
        %vm871 = vcmp.lt.s32.totalorder %v486, 18
        %v872 = vsel %vm871, %v868, %v870
        %v873 = vsel %vm871, %v870, %v868
        %vm874 = vmand %vm496, %vm506
        %vm875 = vmand %vm497, %vm507
        %v876 = vsel %vm874, %v873, 0.0
        %v877 = vsel %vm875, %v872, 0.0
        %v878 = vadd.f32 %v855, %v876
        %v879 = vadd.f32 %v856, %v877
        %s880 = sld [smem:[#allocation6 + $0x10]]
        %s881 = sld [smem:[#allocation6 + $0x41]]
        %v882 = vstv %s880
        %v883 = vmul.f32 %v882, %v465
        %v884 = vmul.f32 %v882, %v466
        %v885 = vstv %s881
        %v886 = vmul.f32 %v885, %v475
        %v887 = vmul.f32 %v885, %v484
        %v888 = vadd.f32 %v883, %v886
        %v889 = vadd.f32 %v884, %v887
        %890 = vrot.lane.b32.xlu0 %v888, 17
        %v891 = vpop.permute.xlu0 %890
        %892 = vrot.lane.b32.xlu0 %v889, 17
        %v893 = vpop.permute.xlu0 %892
        %vm894 = vcmp.lt.s32.totalorder %v486, 17
        %v895 = vsel %vm894, %v891, %v893
        %v896 = vsel %vm894, %v893, %v891
        %vm897 = vmand %vm496, %vm508
        %vm898 = vmand %vm497, %vm509
        %v899 = vsel %vm897, %v896, 0.0
        %v900 = vsel %vm898, %v895, 0.0
        %v901 = vadd.f32 %v878, %v899
        %v902 = vadd.f32 %v879, %v900
        %s903 = sld [smem:[#allocation6 + $0x11]]
        %s904 = sld [smem:[#allocation6 + $0x42]]
        %v905 = vstv %s903
        %v906 = vmul.f32 %v905, %v465
        %v907 = vmul.f32 %v905, %v466
        %v908 = vstv %s904
        %v909 = vmul.f32 %v908, %v475
        %v910 = vmul.f32 %v908, %v484
        %v911 = vadd.f32 %v906, %v909
        %v912 = vadd.f32 %v907, %v910
        %913 = vrot.lane.b32.xlu0 %v911, 16
        %v914 = vpop.permute.xlu0 %913
        %915 = vrot.lane.b32.xlu0 %v912, 16
        %v916 = vpop.permute.xlu0 %915
        %vm917 = vcmp.lt.s32.totalorder %v486, 16
        %v918 = vsel %vm917, %v914, %v916
        %v919 = vsel %vm917, %v916, %v914
        %v920 = vsel %vm496, %v919, 0.0
        %v921 = vsel %vm497, %v918, 0.0
        %v922 = vadd.f32 %v901, %v920
        %v923 = vadd.f32 %v902, %v921
        %s924 = sld [smem:[#allocation6 + $0x12]]
        %s925 = sld [smem:[#allocation6 + $0x43]]
        %v926 = vstv %s924
        %v927 = vmul.f32 %v926, %v465
        %v928 = vmul.f32 %v926, %v466
        %v929 = vstv %s925
        %v930 = vmul.f32 %v929, %v475
        %v931 = vmul.f32 %v929, %v484
        %v932 = vadd.f32 %v927, %v930
        %v933 = vadd.f32 %v928, %v931
        %934 = vrot.lane.b32.xlu0 %v932, 15
        %v935 = vpop.permute.xlu0 %934
        %936 = vrot.lane.b32.xlu0 %v933, 15
        %v937 = vpop.permute.xlu0 %936
        %vm938 = vcmp.lt.s32.totalorder %v486, 15
        %v939 = vsel %vm938, %v935, %v937
        %v940 = vsel %vm938, %v937, %v935
        %vm941 = vmand %vm496, %vm510
        %vm942 = vmand %vm497, %vm511
        %v943 = vsel %vm941, %v940, 0.0
        %v944 = vsel %vm942, %v939, 0.0
        %v945 = vadd.f32 %v922, %v943
        %v946 = vadd.f32 %v923, %v944
        %s947 = sld [smem:[#allocation6 + $0x13]]
        %s948 = sld [smem:[#allocation6 + $0x44]]
        %v949 = vstv %s947
        %v950 = vmul.f32 %v949, %v465
        %v951 = vmul.f32 %v949, %v466
        %v952 = vstv %s948
        %v953 = vmul.f32 %v952, %v475
        %v954 = vmul.f32 %v952, %v484
        %v955 = vadd.f32 %v950, %v953
        %v956 = vadd.f32 %v951, %v954
        %957 = vrot.lane.b32.xlu0 %v955, 14
        %v958 = vpop.permute.xlu0 %957
        %959 = vrot.lane.b32.xlu0 %v956, 14
        %v960 = vpop.permute.xlu0 %959
        %vm961 = vcmp.lt.s32.totalorder %v486, 14
        %v962 = vsel %vm961, %v958, %v960
        %v963 = vsel %vm961, %v960, %v958
        %vm964 = vmand %vm496, %vm512
        %vm965 = vmand %vm497, %vm513
        %v966 = vsel %vm964, %v963, 0.0
        %v967 = vsel %vm965, %v962, 0.0
        %v968 = vadd.f32 %v945, %v966
        %v969 = vadd.f32 %v946, %v967
        %s970 = sld [smem:[#allocation6 + $0x14]]
        %s971 = sld [smem:[#allocation6 + $0x45]]
        %v972 = vstv %s970
        %v973 = vmul.f32 %v972, %v465
        %v974 = vmul.f32 %v972, %v466
        %v975 = vstv %s971
        %v976 = vmul.f32 %v975, %v475
        %v977 = vmul.f32 %v975, %v484
        %v978 = vadd.f32 %v973, %v976
        %v979 = vadd.f32 %v974, %v977
        %980 = vrot.lane.b32.xlu0 %v978, 13
        %v981 = vpop.permute.xlu0 %980
        %982 = vrot.lane.b32.xlu0 %v979, 13
        %v983 = vpop.permute.xlu0 %982
        %vm984 = vcmp.lt.s32.totalorder %v486, 13
        %v985 = vsel %vm984, %v981, %v983
        %v986 = vsel %vm984, %v983, %v981
        %vm987 = vmand %vm496, %vm514
        %vm988 = vmand %vm497, %vm515
        %v989 = vsel %vm987, %v986, 0.0
        %v990 = vsel %vm988, %v985, 0.0
        %v991 = vadd.f32 %v968, %v989
        %v992 = vadd.f32 %v969, %v990
        %s993 = sld [smem:[#allocation6 + $0x15]]
        %s994 = sld [smem:[#allocation6 + $0x46]]
        %v995 = vstv %s993
        %v996 = vmul.f32 %v995, %v465
        %v997 = vmul.f32 %v995, %v466
        %v998 = vstv %s994
        %v999 = vmul.f32 %v998, %v475
        %v1000 = vmul.f32 %v998, %v484
        %v1001 = vadd.f32 %v996, %v999
        %v1002 = vadd.f32 %v997, %v1000
        %1003 = vrot.lane.b32.xlu0 %v1001, 3
        %v1004 = vpop.permute.xlu0 %1003
        %1005 = vrot.lane.b32.xlu0 %v1002, 3
        %v1006 = vpop.permute.xlu0 %1005
        %vm1007 = vcmp.lt.s32.totalorder %v486, 3
        %v1008 = vsel %vm1007, %v1004, %v1006
        %v1009 = vsel %vm1007, %v1006, %v1004
        %v1010 = vsel %vm504, %v1009, 0.0
        %v1011 = vsel %vm505, %v1008, 0.0
        %v1012 = vadd.f32 %v991, %v1010
        %v1013 = vadd.f32 %v992, %v1011
        %s1014 = sld [smem:[#allocation6 + $0x16]]
        %s1015 = sld [smem:[#allocation6 + $0x47]]
        %v1016 = vstv %s1014
        %v1017 = vmul.f32 %v1016, %v465
        %v1018 = vmul.f32 %v1016, %v466
        %v1019 = vstv %s1015
        %v1020 = vmul.f32 %v1019, %v475
        %v1021 = vmul.f32 %v1019, %v484
        %v1022 = vadd.f32 %v1017, %v1020
        %v1023 = vadd.f32 %v1018, %v1021
        %1024 = vrot.lane.b32.xlu0 %v1022, 2
        %v1025 = vpop.permute.xlu0 %1024
        %1026 = vrot.lane.b32.xlu0 %v1023, 2
        %v1027 = vpop.permute.xlu0 %1026
        %vm1028 = vcmp.lt.s32.totalorder %v486, 2
        %v1029 = vsel %vm1028, %v1025, %v1027
        %v1030 = vsel %vm1028, %v1027, %v1025
        %v1031 = vsel %vm506, %v1030, 0.0
        %v1032 = vsel %vm507, %v1029, 0.0
        %v1033 = vadd.f32 %v1012, %v1031
        %v1034 = vadd.f32 %v1013, %v1032
        %s1035 = sld [smem:[#allocation6 + $0x17]]
        %s1036 = sld [smem:[#allocation6 + $0x48]]
        %v1037 = vstv %s1035
        %v1038 = vmul.f32 %v1037, %v465
        %v1039 = vmul.f32 %v1037, %v466
        %v1040 = vstv %s1036
        %v1041 = vmul.f32 %v1040, %v475
        %v1042 = vmul.f32 %v1040, %v484
        %v1043 = vadd.f32 %v1038, %v1041
        %v1044 = vadd.f32 %v1039, %v1042
        %1045 = vrot.lane.b32.xlu0 %v1043, 1
        %v1046 = vpop.permute.xlu0 %1045
        %1047 = vrot.lane.b32.xlu0 %v1044, 1
        %v1048 = vpop.permute.xlu0 %1047
        %vm1049 = vcmp.lt.s32.totalorder %v486, 1
        %v1050 = vsel %vm1049, %v1046, %v1048
        %v1051 = vsel %vm1049, %v1048, %v1046
        %v1052 = vsel %vm508, %v1051, 0.0
        %v1053 = vsel %vm509, %v1050, 0.0
        %v1054 = vadd.f32 %v1033, %v1052
        %v1055 = vadd.f32 %v1034, %v1053
        %s1056 = sld [smem:[#allocation6 + $0x18]]
        %s1057 = sld [smem:[#allocation6 + $0x49]]
        %v1058 = vstv %s1056
        %v1059 = vmul.f32 %v1058, %v465
        %v1060 = vmul.f32 %v1058, %v466
        %v1061 = vstv %s1057
        %v1062 = vmul.f32 %v1061, %v475
        %v1063 = vmul.f32 %v1061, %v484
        %v1064 = vadd.f32 %v1059, %v1062
        %v1065 = vadd.f32 %v1060, %v1063
        %v1066 = vadd.f32 %v1054, %v1064
        %v1067 = vadd.f32 %v1055, %v1065
        %s1068 = sld [smem:[#allocation6 + $0x19]]
        %s1069 = sld [smem:[#allocation6 + $0x4a]]
        %v1070 = vstv %s1068
        %v1071 = vmul.f32 %v1070, %v465
        %v1072 = vmul.f32 %v1070, %v466
        %v1073 = vstv %s1069
        %v1074 = vmul.f32 %v1073, %v475
        %v1075 = vmul.f32 %v1073, %v484
        %v1076 = vadd.f32 %v1071, %v1074
        %v1077 = vadd.f32 %v1072, %v1075
        %1078 = vrot.lane.b32.xlu0 %v1076, 127
        %v1079 = vpop.permute.xlu0 %1078
        %1080 = vrot.lane.b32.xlu0 %v1077, 127
        %v1081 = vpop.permute.xlu0 %1080
        %vm1082 = vcmp.lt.s32.totalorder %v486, 127
        %v1083 = vsel %vm1082, %v1079, %v1081
        %v1084 = vsel %vm1082, %v1081, %v1079
        %v1085 = vsel %vm510, %v1083, 0.0
        %v1086 = vsel %vm511, %v1084, 0.0
        %v1087 = vadd.f32 %v1066, %v1085
        %v1088 = vadd.f32 %v1067, %v1086
        %s1089 = sld [smem:[#allocation6 + $0x1a]]
        %s1090 = sld [smem:[#allocation6 + $0x4b]]
        %v1091 = vstv %s1089
        %v1092 = vmul.f32 %v1091, %v465
        %v1093 = vmul.f32 %v1091, %v466
        %v1094 = vstv %s1090
        %v1095 = vmul.f32 %v1094, %v475
        %v1096 = vmul.f32 %v1094, %v484
        %v1097 = vadd.f32 %v1092, %v1095
        %v1098 = vadd.f32 %v1093, %v1096
        %1099 = vrot.lane.b32.xlu0 %v1097, 126
        %v1100 = vpop.permute.xlu0 %1099
        %1101 = vrot.lane.b32.xlu0 %v1098, 126
        %v1102 = vpop.permute.xlu0 %1101
        %vm1103 = vcmp.lt.s32.totalorder %v486, 126
        %v1104 = vsel %vm1103, %v1100, %v1102
        %v1105 = vsel %vm1103, %v1102, %v1100
        %v1106 = vsel %vm512, %v1104, 0.0
        %v1107 = vsel %vm513, %v1105, 0.0
        %v1108 = vadd.f32 %v1087, %v1106
        %v1109 = vadd.f32 %v1088, %v1107
        %s1110 = sld [smem:[#allocation6 + $0x1b]]
        %s1111 = sld [smem:[#allocation6 + $0x4c]]
        %v1112 = vstv %s1110
        %v1113 = vmul.f32 %v1112, %v465
        %v1114 = vmul.f32 %v1112, %v466
        %v1115 = vstv %s1111
        %v1116 = vmul.f32 %v1115, %v475
        %v1117 = vmul.f32 %v1115, %v484
        %v1118 = vadd.f32 %v1113, %v1116
        %v1119 = vadd.f32 %v1114, %v1117
        %1120 = vrot.lane.b32.xlu0 %v1118, 125
        %v1121 = vpop.permute.xlu0 %1120
        %1122 = vrot.lane.b32.xlu0 %v1119, 125
        %v1123 = vpop.permute.xlu0 %1122
        %vm1124 = vcmp.lt.s32.totalorder %v486, 125
        %v1125 = vsel %vm1124, %v1121, %v1123
        %v1126 = vsel %vm1124, %v1123, %v1121
        %v1127 = vsel %vm514, %v1125, 0.0
        %v1128 = vsel %vm515, %v1126, 0.0
        %v1129 = vadd.f32 %v1108, %v1127
        %v1130 = vadd.f32 %v1109, %v1128
        %s1131 = sld [smem:[#allocation6 + $0x1c]]
        %s1132 = sld [smem:[#allocation6 + $0x4d]]
        %v1133 = vstv %s1131
        %v1134 = vmul.f32 %v1133, %v465
        %v1135 = vmul.f32 %v1133, %v466
        %v1136 = vstv %s1132
        %v1137 = vmul.f32 %v1136, %v475
        %v1138 = vmul.f32 %v1136, %v484
        %v1139 = vadd.f32 %v1134, %v1137
        %v1140 = vadd.f32 %v1135, %v1138
        %1141 = vrot.lane.b32.xlu0 %v1139, 115
        %v1142 = vpop.permute.xlu0 %1141
        %1143 = vrot.lane.b32.xlu0 %v1140, 115
        %v1144 = vpop.permute.xlu0 %1143
        %vm1145 = vcmp.lt.s32.totalorder %v486, 115
        %v1146 = vsel %vm1145, %v1142, %v1144
        %v1147 = vsel %vm1145, %v1144, %v1142
        %vm1148 = vmand %vm498, %vm504
        %vm1149 = vmand %vm499, %vm505
        %v1150 = vsel %vm1148, %v1146, 0.0
        %v1151 = vsel %vm1149, %v1147, 0.0
        %v1152 = vadd.f32 %v1129, %v1150
        %v1153 = vadd.f32 %v1130, %v1151
        %s1154 = sld [smem:[#allocation6 + $0x1d]]
        %s1155 = sld [smem:[#allocation6 + $0x4e]]
        %v1156 = vstv %s1154
        %v1157 = vmul.f32 %v1156, %v465
        %v1158 = vmul.f32 %v1156, %v466
        %v1159 = vstv %s1155
        %v1160 = vmul.f32 %v1159, %v475
        %v1161 = vmul.f32 %v1159, %v484
        %v1162 = vadd.f32 %v1157, %v1160
        %v1163 = vadd.f32 %v1158, %v1161
        %1164 = vrot.lane.b32.xlu0 %v1162, 114
        %v1165 = vpop.permute.xlu0 %1164
        %1166 = vrot.lane.b32.xlu0 %v1163, 114
        %v1167 = vpop.permute.xlu0 %1166
        %vm1168 = vcmp.lt.s32.totalorder %v486, 114
        %v1169 = vsel %vm1168, %v1165, %v1167
        %v1170 = vsel %vm1168, %v1167, %v1165
        %vm1171 = vmand %vm498, %vm506
        %vm1172 = vmand %vm499, %vm507
        %v1173 = vsel %vm1171, %v1169, 0.0
        %v1174 = vsel %vm1172, %v1170, 0.0
        %v1175 = vadd.f32 %v1152, %v1173
        %v1176 = vadd.f32 %v1153, %v1174
        %s1177 = sld [smem:[#allocation6 + $0x1e]]
        %s1178 = sld [smem:[#allocation6 + $0x4f]]
        %v1179 = vstv %s1177
        %v1180 = vmul.f32 %v1179, %v465
        %v1181 = vmul.f32 %v1179, %v466
        %v1182 = vstv %s1178
        %v1183 = vmul.f32 %v1182, %v475
        %v1184 = vmul.f32 %v1182, %v484
        %v1185 = vadd.f32 %v1180, %v1183
        %v1186 = vadd.f32 %v1181, %v1184
        %1187 = vrot.lane.b32.xlu0 %v1185, 113
        %v1188 = vpop.permute.xlu0 %1187
        %1189 = vrot.lane.b32.xlu0 %v1186, 113
        %v1190 = vpop.permute.xlu0 %1189
        %vm1191 = vcmp.lt.s32.totalorder %v486, 113
        %v1192 = vsel %vm1191, %v1188, %v1190
        %v1193 = vsel %vm1191, %v1190, %v1188
        %vm1194 = vmand %vm498, %vm508
        %vm1195 = vmand %vm499, %vm509
        %v1196 = vsel %vm1194, %v1192, 0.0
        %v1197 = vsel %vm1195, %v1193, 0.0
        %v1198 = vadd.f32 %v1175, %v1196
        %v1199 = vadd.f32 %v1176, %v1197
        %s1200 = sld [smem:[#allocation6 + $0x1f]]
        %s1201 = sld [smem:[#allocation6 + $0x50]]
        %v1202 = vstv %s1200
        %v1203 = vmul.f32 %v1202, %v465
        %v1204 = vmul.f32 %v1202, %v466
        %v1205 = vstv %s1201
        %v1206 = vmul.f32 %v1205, %v475
        %v1207 = vmul.f32 %v1205, %v484
        %v1208 = vadd.f32 %v1203, %v1206
        %v1209 = vadd.f32 %v1204, %v1207
        %1210 = vrot.lane.b32.xlu0 %v1208, 112
        %v1211 = vpop.permute.xlu0 %1210
        %1212 = vrot.lane.b32.xlu0 %v1209, 112
        %v1213 = vpop.permute.xlu0 %1212
        %vm1214 = vcmp.lt.s32.totalorder %v486, 112
        %v1215 = vsel %vm1214, %v1211, %v1213
        %v1216 = vsel %vm1214, %v1213, %v1211
        %v1217 = vsel %vm498, %v1215, 0.0
        %v1218 = vsel %vm499, %v1216, 0.0
        %v1219 = vadd.f32 %v1198, %v1217
        %v1220 = vadd.f32 %v1199, %v1218
        %s1221 = sld [smem:[#allocation6 + $0x20]]
        %s1222 = sld [smem:[#allocation6 + $0x51]]
        %v1223 = vstv %s1221
        %v1224 = vmul.f32 %v1223, %v465
        %v1225 = vmul.f32 %v1223, %v466
        %v1226 = vstv %s1222
        %v1227 = vmul.f32 %v1226, %v475
        %v1228 = vmul.f32 %v1226, %v484
        %v1229 = vadd.f32 %v1224, %v1227
        %v1230 = vadd.f32 %v1225, %v1228
        %1231 = vrot.lane.b32.xlu0 %v1229, 111
        %v1232 = vpop.permute.xlu0 %1231
        %1233 = vrot.lane.b32.xlu0 %v1230, 111
        %v1234 = vpop.permute.xlu0 %1233
        %vm1235 = vcmp.lt.s32.totalorder %v486, 111
        %v1236 = vsel %vm1235, %v1232, %v1234
        %v1237 = vsel %vm1235, %v1234, %v1232
        %vm1238 = vmand %vm498, %vm510
        %vm1239 = vmand %vm499, %vm511
        %v1240 = vsel %vm1238, %v1236, 0.0
        %v1241 = vsel %vm1239, %v1237, 0.0
        %v1242 = vadd.f32 %v1219, %v1240
        %v1243 = vadd.f32 %v1220, %v1241
        %s1244 = sld [smem:[#allocation6 + $0x21]]
        %s1245 = sld [smem:[#allocation6 + $0x52]]
        %v1246 = vstv %s1244
        %v1247 = vmul.f32 %v1246, %v465
        %v1248 = vmul.f32 %v1246, %v466
        %v1249 = vstv %s1245
        %v1250 = vmul.f32 %v1249, %v475
        %v1251 = vmul.f32 %v1249, %v484
        %v1252 = vadd.f32 %v1247, %v1250
        %v1253 = vadd.f32 %v1248, %v1251
        %1254 = vrot.lane.b32.xlu0 %v1252, 110
        %v1255 = vpop.permute.xlu0 %1254
        %1256 = vrot.lane.b32.xlu0 %v1253, 110
        %v1257 = vpop.permute.xlu0 %1256
        %vm1258 = vcmp.lt.s32.totalorder %v486, 110
        %v1259 = vsel %vm1258, %v1255, %v1257
        %v1260 = vsel %vm1258, %v1257, %v1255
        %vm1261 = vmand %vm498, %vm512
        %vm1262 = vmand %vm499, %vm513
        %v1263 = vsel %vm1261, %v1259, 0.0
        %v1264 = vsel %vm1262, %v1260, 0.0
        %v1265 = vadd.f32 %v1242, %v1263
        %v1266 = vadd.f32 %v1243, %v1264
        %s1267 = sld [smem:[#allocation6 + $0x22]]
        %s1268 = sld [smem:[#allocation6 + $0x53]]
        %v1269 = vstv %s1267
        %v1270 = vmul.f32 %v1269, %v465
        %v1271 = vmul.f32 %v1269, %v466
        %v1272 = vstv %s1268
        %v1273 = vmul.f32 %v1272, %v475
        %v1274 = vmul.f32 %v1272, %v484
        %v1275 = vadd.f32 %v1270, %v1273
        %v1276 = vadd.f32 %v1271, %v1274
        %1277 = vrot.lane.b32.xlu0 %v1275, 109
        %v1278 = vpop.permute.xlu0 %1277
        %1279 = vrot.lane.b32.xlu0 %v1276, 109
        %v1280 = vpop.permute.xlu0 %1279
        %vm1281 = vcmp.lt.s32.totalorder %v486, 109
        %v1282 = vsel %vm1281, %v1278, %v1280
        %v1283 = vsel %vm1281, %v1280, %v1278
        %vm1284 = vmand %vm498, %vm514
        %vm1285 = vmand %vm499, %vm515
        %v1286 = vsel %vm1284, %v1282, 0.0
        %v1287 = vsel %vm1285, %v1283, 0.0
        %v1288 = vadd.f32 %v1265, %v1286
        %v1289 = vadd.f32 %v1266, %v1287
        %s1290 = sld [smem:[#allocation6 + $0x23]]
        %s1291 = sld [smem:[#allocation6 + $0x54]]
        %v1292 = vstv %s1290
        %v1293 = vmul.f32 %v1292, %v465
        %v1294 = vmul.f32 %v1292, %v466
        %v1295 = vstv %s1291
        %v1296 = vmul.f32 %v1295, %v475
        %v1297 = vmul.f32 %v1295, %v484
        %v1298 = vadd.f32 %v1293, %v1296
        %v1299 = vadd.f32 %v1294, %v1297
        %1300 = vrot.lane.b32.xlu0 %v1298, 99
        %v1301 = vpop.permute.xlu0 %1300
        %1302 = vrot.lane.b32.xlu0 %v1299, 99
        %v1303 = vpop.permute.xlu0 %1302
        %vm1304 = vcmp.lt.s32.totalorder %v486, 99
        %v1305 = vsel %vm1304, %v1301, %v1303
        %v1306 = vsel %vm1304, %v1303, %v1301
        %vm1307 = vmand %vm500, %vm504
        %vm1308 = vmand %vm501, %vm505
        %v1309 = vsel %vm1307, %v1305, 0.0
        %v1310 = vsel %vm1308, %v1306, 0.0
        %v1311 = vadd.f32 %v1288, %v1309
        %v1312 = vadd.f32 %v1289, %v1310
        %s1313 = sld [smem:[#allocation6 + $0x24]]
        %s1314 = sld [smem:[#allocation6 + $0x55]]
        %v1315 = vstv %s1313
        %v1316 = vmul.f32 %v1315, %v465
        %v1317 = vmul.f32 %v1315, %v466
        %v1318 = vstv %s1314
        %v1319 = vmul.f32 %v1318, %v475
        %v1320 = vmul.f32 %v1318, %v484
        %v1321 = vadd.f32 %v1316, %v1319
        %v1322 = vadd.f32 %v1317, %v1320
        %1323 = vrot.lane.b32.xlu0 %v1321, 98
        %v1324 = vpop.permute.xlu0 %1323
        %1325 = vrot.lane.b32.xlu0 %v1322, 98
        %v1326 = vpop.permute.xlu0 %1325
        %vm1327 = vcmp.lt.s32.totalorder %v486, 98
        %v1328 = vsel %vm1327, %v1324, %v1326
        %v1329 = vsel %vm1327, %v1326, %v1324
        %vm1330 = vmand %vm500, %vm506
        %vm1331 = vmand %vm501, %vm507
        %v1332 = vsel %vm1330, %v1328, 0.0
        %v1333 = vsel %vm1331, %v1329, 0.0
        %v1334 = vadd.f32 %v1311, %v1332
        %v1335 = vadd.f32 %v1312, %v1333
        %s1336 = sld [smem:[#allocation6 + $0x25]]
        %s1337 = sld [smem:[#allocation6 + $0x56]]
        %v1338 = vstv %s1336
        %v1339 = vmul.f32 %v1338, %v465
        %v1340 = vmul.f32 %v1338, %v466
        %v1341 = vstv %s1337
        %v1342 = vmul.f32 %v1341, %v475
        %v1343 = vmul.f32 %v1341, %v484
        %v1344 = vadd.f32 %v1339, %v1342
        %v1345 = vadd.f32 %v1340, %v1343
        %1346 = vrot.lane.b32.xlu0 %v1344, 97
        %v1347 = vpop.permute.xlu0 %1346
        %1348 = vrot.lane.b32.xlu0 %v1345, 97
        %v1349 = vpop.permute.xlu0 %1348
        %vm1350 = vcmp.lt.s32.totalorder %v486, 97
        %v1351 = vsel %vm1350, %v1347, %v1349
        %v1352 = vsel %vm1350, %v1349, %v1347
        %vm1353 = vmand %vm500, %vm508
        %vm1354 = vmand %vm501, %vm509
        %v1355 = vsel %vm1353, %v1351, 0.0
        %v1356 = vsel %vm1354, %v1352, 0.0
        %v1357 = vadd.f32 %v1334, %v1355
        %v1358 = vadd.f32 %v1335, %v1356
        %s1359 = sld [smem:[#allocation6 + $0x26]]
        %s1360 = sld [smem:[#allocation6 + $0x57]]
        %v1361 = vstv %s1359
        %v1362 = vmul.f32 %v1361, %v465
        %v1363 = vmul.f32 %v1361, %v466
        %v1364 = vstv %s1360
        %v1365 = vmul.f32 %v1364, %v475
        %v1366 = vmul.f32 %v1364, %v484
        %v1367 = vadd.f32 %v1362, %v1365
        %v1368 = vadd.f32 %v1363, %v1366
        %1369 = vrot.lane.b32.xlu0 %v1367, 96
        %v1370 = vpop.permute.xlu0 %1369
        %1371 = vrot.lane.b32.xlu0 %v1368, 96
        %v1372 = vpop.permute.xlu0 %1371
        %vm1373 = vcmp.lt.s32.totalorder %v486, 96
        %v1374 = vsel %vm1373, %v1370, %v1372
        %v1375 = vsel %vm1373, %v1372, %v1370
        %v1376 = vsel %vm500, %v1374, 0.0
        %v1377 = vsel %vm501, %v1375, 0.0
        %v1378 = vadd.f32 %v1357, %v1376
        %v1379 = vadd.f32 %v1358, %v1377
        %s1380 = sld [smem:[#allocation6 + $0x27]]
        %s1381 = sld [smem:[#allocation6 + $0x58]]
        %v1382 = vstv %s1380
        %v1383 = vmul.f32 %v1382, %v465
        %v1384 = vmul.f32 %v1382, %v466
        %v1385 = vstv %s1381
        %v1386 = vmul.f32 %v1385, %v475
        %v1387 = vmul.f32 %v1385, %v484
        %v1388 = vadd.f32 %v1383, %v1386
        %v1389 = vadd.f32 %v1384, %v1387
        %1390 = vrot.lane.b32.xlu0 %v1388, 95
        %v1391 = vpop.permute.xlu0 %1390
        %1392 = vrot.lane.b32.xlu0 %v1389, 95
        %v1393 = vpop.permute.xlu0 %1392
        %vm1394 = vcmp.lt.s32.totalorder %v486, 95
        %v1395 = vsel %vm1394, %v1391, %v1393
        %v1396 = vsel %vm1394, %v1393, %v1391
        %vm1397 = vmand %vm500, %vm510
        %vm1398 = vmand %vm501, %vm511
        %v1399 = vsel %vm1397, %v1395, 0.0
        %v1400 = vsel %vm1398, %v1396, 0.0
        %v1401 = vadd.f32 %v1378, %v1399
        %v1402 = vadd.f32 %v1379, %v1400
        %s1403 = sld [smem:[#allocation6 + $0x28]]
        %s1404 = sld [smem:[#allocation6 + $0x59]]
        %v1405 = vstv %s1403
        %v1406 = vmul.f32 %v1405, %v465
        %v1407 = vmul.f32 %v1405, %v466
        %v1408 = vstv %s1404
        %v1409 = vmul.f32 %v1408, %v475
        %v1410 = vmul.f32 %v1408, %v484
        %v1411 = vadd.f32 %v1406, %v1409
        %v1412 = vadd.f32 %v1407, %v1410
        %1413 = vrot.lane.b32.xlu0 %v1411, 94
        %v1414 = vpop.permute.xlu0 %1413
        %1415 = vrot.lane.b32.xlu0 %v1412, 94
        %v1416 = vpop.permute.xlu0 %1415
        %vm1417 = vcmp.lt.s32.totalorder %v486, 94
        %v1418 = vsel %vm1417, %v1414, %v1416
        %v1419 = vsel %vm1417, %v1416, %v1414
        %vm1420 = vmand %vm500, %vm512
        %vm1421 = vmand %vm501, %vm513
        %v1422 = vsel %vm1420, %v1418, 0.0
        %v1423 = vsel %vm1421, %v1419, 0.0
        %v1424 = vadd.f32 %v1401, %v1422
        %v1425 = vadd.f32 %v1402, %v1423
        %s1426 = sld [smem:[#allocation6 + $0x29]]
        %s1427 = sld [smem:[#allocation6 + $0x5a]]
        %v1428 = vstv %s1426
        %v1429 = vmul.f32 %v1428, %v465
        %v1430 = vmul.f32 %v1428, %v466
        %v1431 = vstv %s1427
        %v1432 = vmul.f32 %v1431, %v475
        %v1433 = vmul.f32 %v1431, %v484
        %v1434 = vadd.f32 %v1429, %v1432
        %v1435 = vadd.f32 %v1430, %v1433
        %1436 = vrot.lane.b32.xlu0 %v1434, 93
        %v1437 = vpop.permute.xlu0 %1436
        %1438 = vrot.lane.b32.xlu0 %v1435, 93
        %v1439 = vpop.permute.xlu0 %1438
        %vm1440 = vcmp.lt.s32.totalorder %v486, 93
        %v1441 = vsel %vm1440, %v1437, %v1439
        %v1442 = vsel %vm1440, %v1439, %v1437
        %vm1443 = vmand %vm500, %vm514
        %vm1444 = vmand %vm501, %vm515
        %v1445 = vsel %vm1443, %v1441, 0.0
        %v1446 = vsel %vm1444, %v1442, 0.0
        %v1447 = vadd.f32 %v1424, %v1445
        %v1448 = vadd.f32 %v1425, %v1446
        %s1449 = sld [smem:[#allocation6 + $0x2a]]
        %s1450 = sld [smem:[#allocation6 + $0x5b]]
        %v1451 = vstv %s1449
        %v1452 = vmul.f32 %v1451, %v465
        %v1453 = vmul.f32 %v1451, %v466
        %v1454 = vstv %s1450
        %v1455 = vmul.f32 %v1454, %v475
        %v1456 = vmul.f32 %v1454, %v484
        %v1457 = vadd.f32 %v1452, %v1455
        %v1458 = vadd.f32 %v1453, %v1456
        %1459 = vrot.lane.b32.xlu0 %v1457, 83
        %v1460 = vpop.permute.xlu0 %1459
        %1461 = vrot.lane.b32.xlu0 %v1458, 83
        %v1462 = vpop.permute.xlu0 %1461
        %vm1463 = vcmp.lt.s32.totalorder %v486, 83
        %v1464 = vsel %vm1463, %v1460, %v1462
        %v1465 = vsel %vm1463, %v1462, %v1460
        %vm1466 = vmand %vm502, %vm504
        %vm1467 = vmand %vm503, %vm505
        %v1468 = vsel %vm1466, %v1464, 0.0
        %v1469 = vsel %vm1467, %v1465, 0.0
        %v1470 = vadd.f32 %v1447, %v1468
        %v1471 = vadd.f32 %v1448, %v1469
        %s1472 = sld [smem:[#allocation6 + $0x2b]]
        %s1473 = sld [smem:[#allocation6 + $0x5c]]
        %v1474 = vstv %s1472
        %v1475 = vmul.f32 %v1474, %v465
        %v1476 = vmul.f32 %v1474, %v466
        %v1477 = vstv %s1473
        %v1478 = vmul.f32 %v1477, %v475
        %v1479 = vmul.f32 %v1477, %v484
        %v1480 = vadd.f32 %v1475, %v1478
        %v1481 = vadd.f32 %v1476, %v1479
        %1482 = vrot.lane.b32.xlu0 %v1480, 82
        %v1483 = vpop.permute.xlu0 %1482
        %1484 = vrot.lane.b32.xlu0 %v1481, 82
        %v1485 = vpop.permute.xlu0 %1484
        %vm1486 = vcmp.lt.s32.totalorder %v486, 82
        %v1487 = vsel %vm1486, %v1483, %v1485
        %v1488 = vsel %vm1486, %v1485, %v1483
        %vm1489 = vmand %vm502, %vm506
        %vm1490 = vmand %vm503, %vm507
        %v1491 = vsel %vm1489, %v1487, 0.0
        %v1492 = vsel %vm1490, %v1488, 0.0
        %v1493 = vadd.f32 %v1470, %v1491
        %v1494 = vadd.f32 %v1471, %v1492
        %s1495 = sld [smem:[#allocation6 + $0x2c]]
        %s1496 = sld [smem:[#allocation6 + $0x5d]]
        %v1497 = vstv %s1495
        %v1498 = vmul.f32 %v1497, %v465
        %v1499 = vmul.f32 %v1497, %v466
        %v1500 = vstv %s1496
        %v1501 = vmul.f32 %v1500, %v475
        %v1502 = vmul.f32 %v1500, %v484
        %v1503 = vadd.f32 %v1498, %v1501
        %v1504 = vadd.f32 %v1499, %v1502
        %1505 = vrot.lane.b32.xlu0 %v1503, 81
        %v1506 = vpop.permute.xlu0 %1505
        %1507 = vrot.lane.b32.xlu0 %v1504, 81
        %v1508 = vpop.permute.xlu0 %1507
        %vm1509 = vcmp.lt.s32.totalorder %v486, 81
        %v1510 = vsel %vm1509, %v1506, %v1508
        %v1511 = vsel %vm1509, %v1508, %v1506
        %vm1512 = vmand %vm502, %vm508
        %vm1513 = vmand %vm503, %vm509
        %v1514 = vsel %vm1512, %v1510, 0.0
        %v1515 = vsel %vm1513, %v1511, 0.0
        %v1516 = vadd.f32 %v1493, %v1514
        %v1517 = vadd.f32 %v1494, %v1515
        %s1518 = sld [smem:[#allocation6 + $0x2d]]
        %s1519 = sld [smem:[#allocation6 + $0x5e]]
        %v1520 = vstv %s1518
        %v1521 = vmul.f32 %v1520, %v465
        %v1522 = vmul.f32 %v1520, %v466
        %v1523 = vstv %s1519
        %v1524 = vmul.f32 %v1523, %v475
        %v1525 = vmul.f32 %v1523, %v484
        %v1526 = vadd.f32 %v1521, %v1524
        %v1527 = vadd.f32 %v1522, %v1525
        %1528 = vrot.lane.b32.xlu0 %v1526, 80
        %v1529 = vpop.permute.xlu0 %1528
        %1530 = vrot.lane.b32.xlu0 %v1527, 80
        %v1531 = vpop.permute.xlu0 %1530
        %vm1532 = vcmp.lt.s32.totalorder %v486, 80
        %v1533 = vsel %vm1532, %v1529, %v1531
        %v1534 = vsel %vm1532, %v1531, %v1529
        %v1535 = vsel %vm502, %v1533, 0.0
        %v1536 = vsel %vm503, %v1534, 0.0
        %v1537 = vadd.f32 %v1516, %v1535
        %v1538 = vadd.f32 %v1517, %v1536
        %s1539 = sld [smem:[#allocation6 + $0x2e]]
        %s1540 = sld [smem:[#allocation6 + $0x5f]]
        %v1541 = vstv %s1539
        %v1542 = vmul.f32 %v1541, %v465
        %v1543 = vmul.f32 %v1541, %v466
        %v1544 = vstv %s1540
        %v1545 = vmul.f32 %v1544, %v475
        %v1546 = vmul.f32 %v1544, %v484
        %v1547 = vadd.f32 %v1542, %v1545
        %v1548 = vadd.f32 %v1543, %v1546
        %1549 = vrot.lane.b32.xlu0 %v1547, 79
        %v1550 = vpop.permute.xlu0 %1549
        %1551 = vrot.lane.b32.xlu0 %v1548, 79
        %v1552 = vpop.permute.xlu0 %1551
        %vm1553 = vcmp.lt.s32.totalorder %v486, 79
        %v1554 = vsel %vm1553, %v1550, %v1552
        %v1555 = vsel %vm1553, %v1552, %v1550
        %vm1556 = vmand %vm502, %vm510
        %vm1557 = vmand %vm503, %vm511
        %v1558 = vsel %vm1556, %v1554, 0.0
        %v1559 = vsel %vm1557, %v1555, 0.0
        %v1560 = vadd.f32 %v1537, %v1558
        %v1561 = vadd.f32 %v1538, %v1559
        %s1562 = sld [smem:[#allocation6 + $0x2f]]
        %s1563 = sld [smem:[#allocation6 + $0x60]]
        %v1564 = vstv %s1562
        %v1565 = vmul.f32 %v1564, %v465
        %v1566 = vmul.f32 %v1564, %v466
        %v1567 = vstv %s1563
        %v1568 = vmul.f32 %v1567, %v475
        %v1569 = vmul.f32 %v1567, %v484
        %v1570 = vadd.f32 %v1565, %v1568
        %v1571 = vadd.f32 %v1566, %v1569
        %1572 = vrot.lane.b32.xlu0 %v1570, 78
        %v1573 = vpop.permute.xlu0 %1572
        %1574 = vrot.lane.b32.xlu0 %v1571, 78
        %v1575 = vpop.permute.xlu0 %1574
        %vm1576 = vcmp.lt.s32.totalorder %v486, 78
        %v1577 = vsel %vm1576, %v1573, %v1575
        %v1578 = vsel %vm1576, %v1575, %v1573
        %vm1579 = vmand %vm502, %vm512
        %vm1580 = vmand %vm503, %vm513
        %v1581 = vsel %vm1579, %v1577, 0.0
        %v1582 = vsel %vm1580, %v1578, 0.0
        %v1583 = vadd.f32 %v1560, %v1581
        %v1584 = vadd.f32 %v1561, %v1582
        %s1585 = sld [smem:[#allocation6 + $0x30]]
        %s1586 = sld [smem:[#allocation6 + $0x61]]
        %v1587 = vstv %s1585
        %v1588 = vmul.f32 %v1587, %v465
        %v1589 = vmul.f32 %v1587, %v466
        %v1590 = vstv %s1586
        %v1591 = vmul.f32 %v1590, %v475
        %v1592 = vmul.f32 %v1590, %v484
        %v1593 = vadd.f32 %v1588, %v1591
        %v1594 = vadd.f32 %v1589, %v1592
        %1595 = vrot.lane.b32.xlu0 %v1593, 77
        %v1596 = vpop.permute.xlu0 %1595
        %1597 = vrot.lane.b32.xlu0 %v1594, 77
        %v1598 = vpop.permute.xlu0 %1597
        %vm1599 = vcmp.lt.s32.totalorder %v486, 77
        %v1600 = vsel %vm1599, %v1596, %v1598
        %v1601 = vsel %vm1599, %v1598, %v1596
        %vm1602 = vmand %vm502, %vm514
        %vm1603 = vmand %vm503, %vm515
        %v1604 = vsel %vm1602, %v1600, 0.0
        %v1605 = vsel %vm1603, %v1601, 0.0
        %v1606 = vadd.f32 %v1583, %v1604
        %v1607 = vadd.f32 %v1584, %v1605
        %v1608 = vxor.u32 %v1606, 2147483648
        %v1609 = vxor.u32 %v1607, 2147483648
        %v1610 = vmul.f32 %v1608, 1.442695
        %v1611 = vpow.pop %v1610
        %v1612 = vmul.f32 %v1609, 1.442695
        %v1613 = vpow.pop %v1612
        %v1614 = vadd.f32 %v1611, 1.0
        %v1615 = vadd.f32 %v1613, 1.0
        %v1616 = vrcp.pop %v1614
        %v1617 = vmul.f32 %v1614, %v1616
        %v1618 = vsub.f32 1.0, %v1617
        %v1619 = vmul.f32 %v1616, %v1618
        %v1620 = vadd.f32 %v1616, %v1619
        %vm1621 = vweird.f32 %v1614
        %vm1622 = vweird.f32 %v1616
        %vm1623 = vmor %vm1621, %vm1622
        %v1624 = vsel %vm1623, %v1616, %v1620
        %v1625 = vand.u32 2147483647, %v1614
        %vm1626 = vcmp.eq.f32.partialorder %v1625, 8.507059e+37
        %v1627 = vand.u32 %v1614, 2147483648
        %v1628 = vor.u32 1.1754944e-38, %v1627
        %v1629 = vsel %vm1626, %v1628, %v1624
        %v1630 = vmul.f32 1.0, %v1629
        %v1631 = vrcp.pop %v1615
        %v1632 = vmul.f32 %v1615, %v1631
        %v1633 = vsub.f32 1.0, %v1632
        %v1634 = vmul.f32 %v1631, %v1633
        %v1635 = vadd.f32 %v1631, %v1634
        %vm1636 = vweird.f32 %v1615
        %vm1637 = vweird.f32 %v1631
        %vm1638 = vmor %vm1636, %vm1637
        %v1639 = vsel %vm1638, %v1631, %v1635
        %v1640 = vand.u32 2147483647, %v1615
        %vm1641 = vcmp.eq.f32.partialorder %v1640, 8.507059e+37
        %v1642 = vand.u32 %v1615, 2147483648
        %v1643 = vor.u32 1.1754944e-38, %v1642
        %v1644 = vsel %vm1641, %v1643, %v1639
        %v1645 = vmul.f32 1.0, %v1644
        %v1646 = vperm.slane %v1630, 0
        %v1647 = vperm.slane %v1645, 0
        %v1648 = vmul.f32 %v386, %v1646
        %v1649 = vmul.f32 %v386, %v1647
        %v1650 = vmul.f32 %v401, %v1646
        %v1651 = vmul.f32 %v401, %v1647
        %v1652 = vmul.f32 %v416, %v1646
        %v1653 = vmul.f32 %v416, %v1647
        %v1654 = vmul.f32 %v431, %v1646
        %v1655 = vmul.f32 %v431, %v1647
        %v1656 = vadd.f32 %v1648, 1.0
        %v1657 = vadd.f32 %v1649, 1.0
        %v1658 = vadd.f32 %v1650, 1.0
        %v1659 = vadd.f32 %v1651, 1.0
        %v1660 = vadd.f32 %v1652, 1.0
        %v1661 = vadd.f32 %v1653, 1.0
        %v1662 = vadd.f32 %v1654, 1.0
        %v1663 = vadd.f32 %v1655, 1.0
        %v1664 = vmul.f32 %v232, %v1656
        %v1665 = vmul.f32 %v233, %v1657
        %v1666 = vmul.f32 %v234, %v1658
        %v1667 = vmul.f32 %v235, %v1659
        %v1668 = vmul.f32 %v236, %v1660
        %v1669 = vmul.f32 %v237, %v1661
        %v1670 = vmul.f32 %v238, %v1662
        %v1671 = vmul.f32 %v239, %v1663
        %1672 = vst [vmem:[%s231] sm:$0xff] %v1664
        %1673 = vst [vmem:[%s231 + $0x8] sm:$0xff] %v1665
        %1674 = vst [vmem:[%s231 + $0x10] sm:$0xff] %v1666
        %1675 = vst [vmem:[%s231 + $0x18] sm:$0xff] %v1667
        %1676 = vst [vmem:[%s231 + $0x20] sm:$0xff] %v1668
        %1677 = vst [vmem:[%s231 + $0x28] sm:$0xff] %v1669
        %1678 = vst [vmem:[%s231 + $0x30] sm:$0xff] %v1670
        %1679 = vst [vmem:[%s231 + $0x38] sm:$0xff] %v1671
        %s1680 = sand.u32 %s119, 1
        %s1681 = scalar_lea.sflag [#allocation4], %s1680
        %s1682 = sand.u32 %s119, 1
        %s1683 = smul.addr %s1682, 64
        %s1684 = scalar_lea.vmem [#allocation7], %s1683
        // Predicated region
        $region45: #{tpu_custom_call.1} parent=35 // pred_check
          %p1685 = pneg %p129
        $region46: #{tpu_custom_call.1} parent=35 // pred_check_branch
          %1687 = sbr.rel (%p1685) target = $region48
        $region47: #{tpu_custom_call.1} parent=35 // pred_region
          %1689 = vsyncadd %s1681, 0
          %s1690 = smul.addr %s22, 8
          %s1691 = smul.addr %s1690, 8
          %s1692 = scalar_lea.hbm %s4, %s1691
          %s1693 = sshll.u32 %s1684, 4
          %s1694 = int_to_ptr.vmem [resolvable:$true] %s1693
          %s1695 = sshll.u32 %s1692, 4
          %s1696 = int_to_ptr.hbm [resolvable:$true] %s1695
          %1701 = dma.vmem_to_hbm [thread:$0]  %s1694, 1024, %s1696, %s1681, 256, 256, 16
        $region48: #{tpu_custom_call.1} parent=35 // pred_fallthru
          _
      $region36: #{tpu_custom_call.1} parent=5 // pred_fallthru
        _
      %p1702 = scmp.le.s32.totalorder 2, %s17
      // Predicated region
      $region49: #{tpu_custom_call.1} parent=5 // pred_check
        %p1703 = pneg %p1702
      $region50: #{tpu_custom_call.1} parent=5 // pred_check_branch
        %1705 = sbr.rel (%p1703) target = $region52
      $region51: #{tpu_custom_call.1} parent=5 // pred_region
        %s1706 = ssub.s32 %s17, 2
        // Predicated region
        $region53: #{tpu_custom_call.1} parent=51 // pred_check
          %p1707 = pneg %p135
        $region54: #{tpu_custom_call.1} parent=51 // pred_check_branch
          %1709 = sbr.rel (%p1707) target = $region56
        $region55: #{tpu_custom_call.1} parent=51 // pred_region
          %s1710 = sand.u32 %s120, 1
          %s1711 = scalar_lea.sflag [#allocation4], %s1710
          %s1712 = sand.u32 %s120, 1
          %s1713 = smul.addr %s1712, 64
          %s1714 = scalar_lea.vmem [#allocation7], %s1713
          %1716 = dma.done %s1711, 1024
        $region56: #{tpu_custom_call.1} parent=51 // pred_fallthru
          _
      $region52: #{tpu_custom_call.1} parent=5 // pred_fallthru
        _
    $region6: #{tpu_custom_call.1} parent=1 // loop_footer
      %s21 = sadd.s32 1, %s17
    $region7: #{tpu_custom_call.1} parent=1 // loop_footer_branch
      %16 = sbr.rel target = $region3
    $region8: #{tpu_custom_call.1} parent=1 // loop_exit
      _
    %1717 = vsyncpa [#allocation3], 1
    %s1718 = scalar_lea.sflag [#allocation3], 1
    %1719 = vsyncpa %s1718, 1
    %1720 = vsyncpa [#allocation4], 1
    %s1721 = scalar_lea.sflag [#allocation4], 1
    %1722 = vsyncpa %s1721, 1
    %1723 = vsyncpa [#allocation5], 1
    %s1724 = scalar_lea.sflag [#allocation5], 1
    %1725 = vsyncpa %s1724, 1

</llo_original>
